<compile_context>
chip_gen: v5e
topology: v5e:2x2
jax: 0.10.0
libtpu: 0.0.40
codegen_flags: <defaults>
</compile_context>

<pallas_src>
import functools

import jax
import jax.numpy as jnp
from jax.experimental import pallas as pl
from jax.experimental.pallas import tpu as pltpu


# ---------------------------------------------------------------------------
# Pallas kernel: full encoder stack for a block of the batch axis
# ---------------------------------------------------------------------------
def _encoder_stack_kernel(tok_ref, pos_ref, bias_ref,
                          wqkv_ref, bqkv_ref, wo_ref, bo_ref,
                          ln1g_ref, ln1b_ref, w1_ref, b1_ref,
                          w2_ref, b2_ref, ln2g_ref, ln2b_ref,
                          out_ref, *, num_layers, num_heads, head_dim,
                          nb, win, out_b, out_seq):
    """tok_ref: (nb*win, H) token embeddings (rows ordered batch-major:
    (batch, window, token)); pos_ref: (win, H); bias_ref: (nb, 1, win) additive
    key mask (0 = keep, -1e9 = masked); out_ref: (L+1, out_b, out_seq, H) with
    out_seq = (nb // out_b) * win, layer 0 = embedding output."""
    hidden = num_heads * head_dim
    seq = nb * win
    hb = num_heads * nb                      # merged (head, window-element) batch

    # Embeddings = token emb (XLA gather) + positional emb; emitted as layer 0
    # directly in the final concatenated-window layout (no wrapper concat).
    x = (tok_ref[...].reshape(nb, win, hidden) + pos_ref[...][None, :, :]
         ).reshape(seq, hidden)
    out_ref[0] = x.reshape(out_b, out_seq, hidden)

    # Key-mask bias, hoisted once per kernel and pre-broadcast to the merged
    # (heads*nb, win, win) score shape (JAX does not CSE broadcast_in_dim).
    bias = jnp.broadcast_to(
        jnp.concatenate([bias_ref[...]] * num_heads, axis=0), (hb, win, win))

    def layer_norm(v, g, b):
        mu = jnp.mean(v, axis=-1, keepdims=True)
        d = v - mu
        var = jnp.mean(d * d, axis=-1, keepdims=True)
        return d * jax.lax.rsqrt(var + 1e-5) * g + b

    for l in range(num_layers):                       # static unroll over layers
        # ---- fused QKV projection: one (H, 3H) bf16 MXU matmul --------------
        # (softmax 1/sqrt(head_dim) already folded into the Q block of wqkv)
        qkv = jnp.dot(x.astype(jnp.bfloat16), wqkv_ref[l],
                      preferred_element_type=jnp.float32) + bqkv_ref[l]  # (seq, 3H)

        # ---- merge all heads into one batch axis: (heads*nb, win, head_dim) --
        # Only lane slices + leading-axis concats (no 4-D transpose needed).
        def split_heads(base):
            parts = [qkv[:, base + h * head_dim: base + (h + 1) * head_dim]
                     .reshape(nb, win, head_dim) for h in range(num_heads)]
            return jnp.concatenate(parts, axis=0)

        q = split_heads(0).astype(jnp.bfloat16)
        k = split_heads(hidden).astype(jnp.bfloat16)
        v = split_heads(2 * hidden).astype(jnp.bfloat16)

        # ---- attention, fused over all heads and window elements -------------
        s = jnp.einsum('bqd,bkd->bqk', q, k,
                       preferred_element_type=jnp.float32) + bias      # (hb,win,win)
        m = jnp.max(s, axis=-1, keepdims=True)
        e = jnp.exp(s - m)
        p = e * pl.reciprocal(jnp.sum(e, axis=-1, keepdims=True), approx=True)
        o = jnp.einsum('bqk,bkd->bqd', p.astype(jnp.bfloat16), v,
                       preferred_element_type=jnp.float32)             # (hb,win,hd)

        # merge heads back to (seq, H) and do ONE (seq,H)@(H,H) output projection
        ctx = jnp.concatenate(
            [o[h * nb:(h + 1) * nb].reshape(seq, head_dim)
             for h in range(num_heads)], axis=-1)
        attn = jnp.dot(ctx.astype(jnp.bfloat16), wo_ref[l],
                       preferred_element_type=jnp.float32) + bo_ref[l]
        x = layer_norm(x + attn, ln1g_ref[l], ln1b_ref[l])

        # ---- feed-forward ----------------------------------------------------
        ff = jnp.dot(x.astype(jnp.bfloat16), w1_ref[l],
                     preferred_element_type=jnp.float32) + b1_ref[l]
        # TODO(synk): PyTorch nn.GELU defaults to the exact erf form; the tanh
        # approximation is used here (EUP-friendly, tiny numeric difference).
        ff = jax.nn.gelu(ff, approximate=True)
        ff = jnp.dot(ff.astype(jnp.bfloat16), w2_ref[l],
                     preferred_element_type=jnp.float32) + b2_ref[l]
        x = layer_norm(x + ff, ln2g_ref[l], ln2b_ref[l])

        out_ref[l + 1] = x.reshape(out_b, out_seq, hidden)


def _num_grid_blocks(out_b, wins_per_b, win):
    """2-way 'parallel' batch split only on multi-TensorCore parts (v4/v5p
    megacore, v7x).  On single-TC v5e/v6e it would just add a serial grid step
    (~0.35us + another input DMA setup) to a kernel that is a few us total."""
    try:
        kind = jax.devices()[0].device_kind.lower()
    except Exception:
        kind = ""
    single_tc = any(t in kind for t in
                    ("v5e", "v5 lite", "v5lite", "v6e", "v6 lite", "v6lite"))
    if single_tc:
        return 1
    if out_b % 2 == 0 and ((out_b // 2) * wins_per_b * win) % 8 == 0:
        return 2
    return 1


def encoder_stack(tok_x, pos, bias, p, *, num_layers, num_heads, head_dim,
                  out_b, wins_per_b, win):
    """tok_x: (out_b*wins_per_b*win, H) token embeddings, rows batch-major
    (batch, window, token); pos: (win, H); bias: (out_b*wins_per_b, 1, win).
    Returns (num_layers+1, out_b, wins_per_b*win, H) — layer 0 is the embedding
    output, already in the final concatenated-window layout."""
    hidden = num_heads * head_dim
    out_seq = wins_per_b * win

    num_blocks = _num_grid_blocks(out_b, wins_per_b, win)
    b_blk = out_b // num_blocks
    nb_blk = b_blk * wins_per_b
    seq_blk = nb_blk * win

    kernel = functools.partial(
        _encoder_stack_kernel, num_layers=num_layers, num_heads=num_heads,
        head_dim=head_dim, nb=nb_blk, win=win, out_b=b_blk, out_seq=out_seq)

    # TODO(synk): at real-checkpoint sizes (esp. v7x's 64 MiB VMEM) this
    # resident-weight stack + static layer unroll must switch to streaming
    # per-layer weights over an 'arbitrary' grid axis; fine at this toy size.
    def resident(arr):
        zeros = (0,) * arr.ndim
        return pl.BlockSpec(arr.shape, lambda i, _z=zeros: _z)

    weights = [p['wqkv'], p['bqkv'], p['wo'], p['bo'],
               p['ln1g'], p['ln1b'], p['w1'], p['b1'],
               p['w2'], p['b2'], p['ln2g'], p['ln2b']]

    in_specs = [pl.BlockSpec((seq_blk, hidden), lambda i: (i, 0)),    # token emb
                pl.BlockSpec((win, hidden), lambda i: (0, 0)),        # pos emb
                pl.BlockSpec((nb_blk, 1, win), lambda i: (i, 0, 0))]  # key bias
    in_specs += [resident(w) for w in weights]                        # VMEM-resident

    out_specs = pl.BlockSpec((num_layers + 1, b_blk, out_seq, hidden),
                             lambda i: (0, i, 0, 0))

    return pl.pallas_call(
        kernel,
        out_shape=jax.ShapeDtypeStruct(
            (num_layers + 1, out_b, out_seq, hidden), jnp.float32),
        grid=(num_blocks,),
        in_specs=in_specs,
        out_specs=out_specs,
        compiler_params=pltpu.CompilerParams(dimension_semantics=("parallel",)),
    )(tok_x, pos, bias, *weights)


# ---------------------------------------------------------------------------
# Synthetic "text model" + TextExtractorModel forward semantics
# ---------------------------------------------------------------------------
class TextExtractorModel:
    def __init__(self, *, vocab=50, hidden=32, ffn=64, num_layers=2, num_heads=2,
                 max_pos=64, window_size=8, stride=None, key=None):
        assert hidden % num_heads == 0
        self.hidden = hidden
        self.ffn = ffn
        self.num_layers = num_layers
        self.num_heads = num_heads
        self.head_dim = hidden // num_heads
        self.window_size = window_size
        self.stride = stride if stride is not None else window_size // 2

        key = key if key is not None else jax.random.PRNGKey(0)
        keys = jax.random.split(key, 2 + num_layers)
        s = 0.02
        self.tok_emb = s * jax.random.normal(keys[0], (vocab, hidden), jnp.float32)
        self.pos_emb = s * jax.random.normal(keys[1], (max_pos, hidden), jnp.float32)

        scale = 1.0 / (self.head_dim ** 0.5)
        wqkv, bqkv, wo, bo = [], [], [], []
        ln1g, ln1b, w1, b1, w2, b2, ln2g, ln2b = [], [], [], [], [], [], [], []
        for i in range(num_layers):
            lk = jax.random.split(keys[2 + i], 6)
            wq = s * jax.random.normal(lk[0], (hidden, hidden), jnp.float32)
            wk = s * jax.random.normal(lk[1], (hidden, hidden), jnp.float32)
            wv = s * jax.random.normal(lk[2], (hidden, hidden), jnp.float32)
            bq = jnp.zeros((1, hidden), jnp.float32)
            bk = jnp.zeros((1, hidden), jnp.float32)
            bv = jnp.zeros((1, hidden), jnp.float32)
            # Fuse QKV and fold the attention scale into the Q block.
            wqkv.append(jnp.concatenate([wq * scale, wk, wv], axis=1))
            bqkv.append(jnp.concatenate([bq * scale, bk, bv], axis=1))
            wo.append(s * jax.random.normal(lk[3], (hidden, hidden), jnp.float32))
            bo.append(jnp.zeros((1, hidden), jnp.float32))
            ln1g.append(jnp.ones((1, hidden), jnp.float32))
            ln1b.append(jnp.zeros((1, hidden), jnp.float32))
            w1.append(s * jax.random.normal(lk[4], (hidden, ffn), jnp.float32))
            b1.append(jnp.zeros((1, ffn), jnp.float32))
            w2.append(s * jax.random.normal(lk[5], (ffn, hidden), jnp.float32))
            b2.append(jnp.zeros((1, hidden), jnp.float32))
            ln2g.append(jnp.ones((1, hidden), jnp.float32))
            ln2b.append(jnp.zeros((1, hidden), jnp.float32))

        # MXU matmul weights in bf16 (f32 accumulation in-kernel); biases and
        # layernorm params stay f32.  Stacked over layers on the leading axis.
        self.params = {
            'wqkv': jnp.stack(wqkv).astype(jnp.bfloat16),
            'bqkv': jnp.stack(bqkv),
            'wo': jnp.stack(wo).astype(jnp.bfloat16),
            'bo': jnp.stack(bo),
            'ln1g': jnp.stack(ln1g), 'ln1b': jnp.stack(ln1b),
            'w1': jnp.stack(w1).astype(jnp.bfloat16), 'b1': jnp.stack(b1),
            'w2': jnp.stack(w2).astype(jnp.bfloat16), 'b2': jnp.stack(b2),
            'ln2g': jnp.stack(ln2g), 'ln2b': jnp.stack(ln2b),
        }

    # hidden_states à la HF: (embeddings, layer_1, ..., layer_N), emitted by the
    # kernel directly as (L+1, out_b, wins_per_b*W, H).
    def text_model(self, input_ids, attention_mask, *, out_b, wins_per_b):
        NB, W = input_ids.shape                      # NB = out_b * wins_per_b
        # TODO(synk): the token-embedding gather has no clean in-kernel
        # equivalent worth writing at this size; it stays an XLA gather here.
        tok = jnp.take(self.tok_emb, input_ids, axis=0).reshape(NB * W, self.hidden)
        bias = ((1.0 - attention_mask.astype(jnp.float32)) * (-1e9)).reshape(NB, 1, W)
        return encoder_stack(tok, self.pos_emb[:W], bias, self.params,
                             num_layers=self.num_layers,
                             num_heads=self.num_heads,
                             head_dim=self.head_dim,
                             out_b=out_b, wins_per_b=wins_per_b, win=W)

    def forward(self, input_ids, attention_mask):
        B, L = input_ids.shape
        W = self.window_size
        starts = [st for st in range(0, L, self.stride) if st + W <= L]

        if not starts:
            # fallback: whole sequence -> (num_layers+1, B, L, H)
            return self.text_model(input_ids, attention_mask, out_b=B, wins_per_b=1)

        nw = len(starts)
        # Batch-major window stacking (B, nw, W): kernel rows are already in the
        # final (batch, window*W) order, so no post-kernel transpose/concat.
        w_ids = jnp.stack([input_ids[:, st:st + W] for st in starts],
                          axis=1).reshape(B * nw, W)
        w_mask = jnp.stack([attention_mask[:, st:st + W] for st in starts],
                           axis=1).reshape(B * nw, W)
        return self.text_model(w_ids, w_mask, out_b=B, wins_per_b=nw)


if __name__ == "__main__":
    key = jax.random.PRNGKey(0)
    k_model, k_ids = jax.random.split(key)

    B, L = 2, 16
    model = TextExtractorModel(vocab=50, hidden=32, ffn=64, num_layers=2,
                               num_heads=2, max_pos=64, window_size=8, stride=4,
                               key=k_model)

    input_ids = jax.random.randint(k_ids, (B, L), 0, 50, dtype=jnp.int32)
    attention_mask = jnp.ones((B, L), jnp.int32)
    attention_mask = attention_mask.at[1, 13:].set(0)   # mask some tail tokens

    # One jit region: gather + window stacking + pallas kernel = one dispatch.
    fwd = jax.jit(model.forward)
    out = jax.block_until_ready(fwd(input_ids, attention_mask))

    # windows: starts 0,4,8 -> 3 windows of 8 tokens; layers+embeddings = 3
    assert out.shape == (model.num_layers + 1, B, 3 * model.window_size,
                         model.hidden), out.shape
    assert bool(jnp.all(jnp.isfinite(out)))
    print("KERNEL_OK")
</pallas_src>

<mosaic_0001>
module attributes {stable_mosaic.version = 11 : i64} {
  func.func @_encoder_stack_kernel(%arg0: i32, %arg1: memref<24x32xf32, #tpu.memory_space<vmem>>, %arg2: memref<8x32xf32, #tpu.memory_space<vmem>>, %arg3: memref<3x1x8xf32, #tpu.memory_space<vmem>>, %arg4: memref<2x32x96xbf16, #tpu.memory_space<vmem>>, %arg5: memref<2x1x96xf32, #tpu.memory_space<vmem>>, %arg6: memref<2x32x32xbf16, #tpu.memory_space<vmem>>, %arg7: memref<2x1x32xf32, #tpu.memory_space<vmem>>, %arg8: memref<2x1x32xf32, #tpu.memory_space<vmem>>, %arg9: memref<2x1x32xf32, #tpu.memory_space<vmem>>, %arg10: memref<2x32x64xbf16, #tpu.memory_space<vmem>>, %arg11: memref<2x1x64xf32, #tpu.memory_space<vmem>>, %arg12: memref<2x64x32xbf16, #tpu.memory_space<vmem>>, %arg13: memref<2x1x32xf32, #tpu.memory_space<vmem>>, %arg14: memref<2x1x32xf32, #tpu.memory_space<vmem>>, %arg15: memref<2x1x32xf32, #tpu.memory_space<vmem>>, %arg16: memref<3x1x24x32xf32, #tpu.memory_space<vmem>>) attributes {dimension_semantics = [#tpu.dimension_semantics<parallel>], iteration_bounds = array<i64: 2>, scalar_prefetch = 0 : i64, scratch_operands = 0 : i64, tpu.core_type = #tpu.core_type<tc>, window_params = [{transform_indices = @transform_0, window_bounds = array<i64: 24, 32>}, {pipeline_mode = #tpu.pipeline_mode<synchronous>, transform_indices = @transform_1, window_bounds = array<i64: 8, 32>}, {transform_indices = @transform_2, window_bounds = array<i64: 3, 1, 8>}, {pipeline_mode = #tpu.pipeline_mode<synchronous>, transform_indices = @transform_3, window_bounds = array<i64: 2, 32, 96>}, {pipeline_mode = #tpu.pipeline_mode<synchronous>, transform_indices = @transform_4, window_bounds = array<i64: 2, 1, 96>}, {pipeline_mode = #tpu.pipeline_mode<synchronous>, transform_indices = @transform_5, window_bounds = array<i64: 2, 32, 32>}, {pipeline_mode = #tpu.pipeline_mode<synchronous>, transform_indices = @transform_6, window_bounds = array<i64: 2, 1, 32>}, {pipeline_mode = #tpu.pipeline_mode<synchronous>, transform_indices = @transform_7, window_bounds = array<i64: 2, 1, 32>}, {pipeline_mode = #tpu.pipeline_mode<synchronous>, transform_indices = @transform_8, window_bounds = array<i64: 2, 1, 32>}, {pipeline_mode = #tpu.pipeline_mode<synchronous>, transform_indices = @transform_9, window_bounds = array<i64: 2, 32, 64>}, {pipeline_mode = #tpu.pipeline_mode<synchronous>, transform_indices = @transform_10, window_bounds = array<i64: 2, 1, 64>}, {pipeline_mode = #tpu.pipeline_mode<synchronous>, transform_indices = @transform_11, window_bounds = array<i64: 2, 64, 32>}, {pipeline_mode = #tpu.pipeline_mode<synchronous>, transform_indices = @transform_12, window_bounds = array<i64: 2, 1, 32>}, {pipeline_mode = #tpu.pipeline_mode<synchronous>, transform_indices = @transform_13, window_bounds = array<i64: 2, 1, 32>}, {pipeline_mode = #tpu.pipeline_mode<synchronous>, transform_indices = @transform_14, window_bounds = array<i64: 2, 1, 32>}, {transform_indices = @transform_15, window_bounds = array<i64: 3, 1, 24, 32>}]} {
    %c0 = arith.constant 0 : index
    %c0_0 = arith.constant 0 : index
    %0 = vector.load %arg1[%c0, %c0_0] : memref<24x32xf32, #tpu.memory_space<vmem>>, vector<24x32xf32>
    %1 = vector.shape_cast %0 : vector<24x32xf32> to vector<3x8x32xf32>
    %c0_1 = arith.constant 0 : index
    %c0_2 = arith.constant 0 : index
    %2 = vector.load %arg2[%c0_1, %c0_2] : memref<8x32xf32, #tpu.memory_space<vmem>>, vector<8x32xf32>
    %3 = vector.shape_cast %2 : vector<8x32xf32> to vector<1x8x32xf32>
    %4 = vector.broadcast %3 : vector<1x8x32xf32> to vector<3x8x32xf32>
    %5 = arith.addf %1, %4 : vector<3x8x32xf32>
    %6 = vector.shape_cast %5 : vector<3x8x32xf32> to vector<24x32xf32>
    %7 = vector.shape_cast %6 : vector<24x32xf32> to vector<1x24x32xf32>
    %c0_3 = arith.constant 0 : index
    %c0_4 = arith.constant 0 : index
    %c0_5 = arith.constant 0 : index
    %c0_6 = arith.constant 0 : index
    %8 = vector.load %arg16[%c0_3, %c0_4, %c0_5, %c0_6] : memref<3x1x24x32xf32, #tpu.memory_space<vmem>>, vector<1x1x24x32xf32>
    %9 = vector.shape_cast %8 : vector<1x1x24x32xf32> to vector<1x24x32xf32>
    %10 = vector.shape_cast %7 : vector<1x24x32xf32> to vector<1x1x24x32xf32>
    tpu.vector_store %arg16[%c0_3, %c0_4, %c0_5, %c0_6], %10 {strides = array<i32>} : memref<3x1x24x32xf32, #tpu.memory_space<vmem>>, vector<1x1x24x32xf32>,
    %c0_7 = arith.constant 0 : index
    %c0_8 = arith.constant 0 : index
    %c0_9 = arith.constant 0 : index
    %11 = vector.load %arg3[%c0_7, %c0_8, %c0_9] : memref<3x1x8xf32, #tpu.memory_space<vmem>>, vector<3x1x8xf32>
    %12 = tpu.concatenate %11, %11 in 0 : vector<3x1x8xf32>, vector<3x1x8xf32> -> vector<6x1x8xf32>
    %13 = vector.shape_cast %12 : vector<6x1x8xf32> to vector<6x1x8xf32>
    %14 = vector.broadcast %13 : vector<6x1x8xf32> to vector<6x8x8xf32>
    %15 = arith.truncf %6 : vector<24x32xf32> to vector<24x32xbf16>
    %c0_10 = arith.constant 0 : index
    %c0_11 = arith.constant 0 : index
    %c0_12 = arith.constant 0 : index
    %16 = vector.load %arg4[%c0_10, %c0_11, %c0_12] : memref<2x32x96xbf16, #tpu.memory_space<vmem>>, vector<1x32x96xbf16>
    %17 = vector.shape_cast %16 : vector<1x32x96xbf16> to vector<32x96xbf16>
    %cst = arith.constant dense<0.000000e+00> : vector<24x96xf32>
    %18 = tpu.matmul %15, %17, %cst {dimension_numbers = #tpu.dot_dimension_numbers<[1], [0], [0], [1], [0, 0, 1, 1], [], []>} : vector<24x32xbf16>, vector<32x96xbf16>, vector<24x96xf32> -> vector<24x96xf32>
    %c0_13 = arith.constant 0 : index
    %c0_14 = arith.constant 0 : index
    %c0_15 = arith.constant 0 : index
    %19 = vector.load %arg5[%c0_13, %c0_14, %c0_15] : memref<2x1x96xf32, #tpu.memory_space<vmem>>, vector<1x1x96xf32>
    %20 = vector.shape_cast %19 : vector<1x1x96xf32> to vector<1x96xf32>
    %21 = vector.broadcast %20 : vector<1x96xf32> to vector<24x96xf32>
    %22 = arith.addf %18, %21 : vector<24x96xf32>
    %23 = vector.extract_strided_slice %22 {offsets = [0, 0], sizes = [24, 16], strides = [1, 1]} : vector<24x96xf32> to vector<24x16xf32>
    %24 = vector.shape_cast %23 : vector<24x16xf32> to vector<3x8x16xf32>
    %25 = vector.extract_strided_slice %22 {offsets = [0, 16], sizes = [24, 16], strides = [1, 1]} : vector<24x96xf32> to vector<24x16xf32>
    %26 = vector.shape_cast %25 : vector<24x16xf32> to vector<3x8x16xf32>
    %27 = tpu.concatenate %24, %26 in 0 : vector<3x8x16xf32>, vector<3x8x16xf32> -> vector<6x8x16xf32>
    %28 = arith.truncf %27 : vector<6x8x16xf32> to vector<6x8x16xbf16>
    %29 = vector.extract_strided_slice %22 {offsets = [0, 32], sizes = [24, 16], strides = [1, 1]} : vector<24x96xf32> to vector<24x16xf32>
    %30 = vector.shape_cast %29 : vector<24x16xf32> to vector<3x8x16xf32>
    %31 = vector.extract_strided_slice %22 {offsets = [0, 48], sizes = [24, 16], strides = [1, 1]} : vector<24x96xf32> to vector<24x16xf32>
    %32 = vector.shape_cast %31 : vector<24x16xf32> to vector<3x8x16xf32>
    %33 = tpu.concatenate %30, %32 in 0 : vector<3x8x16xf32>, vector<3x8x16xf32> -> vector<6x8x16xf32>
    %34 = arith.truncf %33 : vector<6x8x16xf32> to vector<6x8x16xbf16>
    %35 = vector.extract_strided_slice %22 {offsets = [0, 64], sizes = [24, 16], strides = [1, 1]} : vector<24x96xf32> to vector<24x16xf32>
    %36 = vector.shape_cast %35 : vector<24x16xf32> to vector<3x8x16xf32>
    %37 = vector.extract_strided_slice %22 {offsets = [0, 80], sizes = [24, 16], strides = [1, 1]} : vector<24x96xf32> to vector<24x16xf32>
    %38 = vector.shape_cast %37 : vector<24x16xf32> to vector<3x8x16xf32>
    %39 = tpu.concatenate %36, %38 in 0 : vector<3x8x16xf32>, vector<3x8x16xf32> -> vector<6x8x16xf32>
    %40 = arith.truncf %39 : vector<6x8x16xf32> to vector<6x8x16xbf16>
    "tpu.trace_start"() <{level = 10 : i32, message = "bqd,bkd->bqk"}> : () -> ()
    %cst_16 = arith.constant dense<0.000000e+00> : vector<6x8x8xf32>
    %41 = tpu.matmul %28, %34, %cst_16 {dimension_numbers = #tpu.dot_dimension_numbers<[2], [2], [1], [1], [0, 0, 0, 1, 1, 1], [0], [0]>} : vector<6x8x16xbf16>, vector<6x8x16xbf16>, vector<6x8x8xf32> -> vector<6x8x8xf32>
    "tpu.trace_stop"() : () -> ()
    %42 = arith.addf %41, %14 : vector<6x8x8xf32>
    %cst_17 = arith.constant dense<0xFF800000> : vector<6x8xf32>
    %43 = vector.multi_reduction <maximumf>, %42, %cst_17 [2] : vector<6x8x8xf32> to vector<6x8xf32>
    %44 = vector.shape_cast %43 : vector<6x8xf32> to vector<6x8x1xf32>
    %45 = vector.broadcast %44 : vector<6x8x1xf32> to vector<6x8x8xf32>
    %46 = arith.subf %42, %45 : vector<6x8x8xf32>
    %47 = math.exp %46 : vector<6x8x8xf32>
    %cst_18 = arith.constant dense<0.000000e+00> : vector<6x8xf32>
    %48 = vector.multi_reduction <add>, %47, %cst_18 [2] : vector<6x8x8xf32> to vector<6x8xf32>
    %49 = vector.shape_cast %48 : vector<6x8xf32> to vector<6x8x1xf32>
    %50 = tpu.reciprocal %49 {approx = true} : vector<6x8x1xf32> -> vector<6x8x1xf32>
    %51 = vector.broadcast %50 : vector<6x8x1xf32> to vector<6x8x8xf32>
    %52 = arith.mulf %47, %51 : vector<6x8x8xf32>
    %53 = arith.truncf %52 : vector<6x8x8xf32> to vector<6x8x8xbf16>
    "tpu.trace_start"() <{level = 10 : i32, message = "bqk,bkd->bqd"}> : () -> ()
    %cst_19 = arith.constant dense<0.000000e+00> : vector<6x8x16xf32>
    %54 = tpu.matmul %53, %40, %cst_19 {dimension_numbers = #tpu.dot_dimension_numbers<[2], [1], [1], [2], [0, 0, 0, 1, 1, 2], [0], [0]>} : vector<6x8x8xbf16>, vector<6x8x16xbf16>, vector<6x8x16xf32> -> vector<6x8x16xf32>
    "tpu.trace_stop"() : () -> ()
    %55 = vector.extract_strided_slice %54 {offsets = [0, 0, 0], sizes = [3, 8, 16], strides = [1, 1, 1]} : vector<6x8x16xf32> to vector<3x8x16xf32>
    %56 = vector.shape_cast %55 : vector<3x8x16xf32> to vector<24x16xf32>
    %57 = vector.extract_strided_slice %54 {offsets = [3, 0, 0], sizes = [3, 8, 16], strides = [1, 1, 1]} : vector<6x8x16xf32> to vector<3x8x16xf32>
    %58 = vector.shape_cast %57 : vector<3x8x16xf32> to vector<24x16xf32>
    %59 = tpu.concatenate %56, %58 in 1 : vector<24x16xf32>, vector<24x16xf32> -> vector<24x32xf32>
    %60 = arith.truncf %59 : vector<24x32xf32> to vector<24x32xbf16>
    %c0_20 = arith.constant 0 : index
    %c0_21 = arith.constant 0 : index
    %c0_22 = arith.constant 0 : index
    %61 = vector.load %arg6[%c0_20, %c0_21, %c0_22] : memref<2x32x32xbf16, #tpu.memory_space<vmem>>, vector<1x32x32xbf16>
    %62 = vector.shape_cast %61 : vector<1x32x32xbf16> to vector<32x32xbf16>
    %cst_23 = arith.constant dense<0.000000e+00> : vector<24x32xf32>
    %63 = tpu.matmul %60, %62, %cst_23 {dimension_numbers = #tpu.dot_dimension_numbers<[1], [0], [0], [1], [0, 0, 1, 1], [], []>} : vector<24x32xbf16>, vector<32x32xbf16>, vector<24x32xf32> -> vector<24x32xf32>
    %c0_24 = arith.constant 0 : index
    %c0_25 = arith.constant 0 : index
    %c0_26 = arith.constant 0 : index
    %64 = vector.load %arg7[%c0_24, %c0_25, %c0_26] : memref<2x1x32xf32, #tpu.memory_space<vmem>>, vector<1x1x32xf32>
    %65 = vector.shape_cast %64 : vector<1x1x32xf32> to vector<1x32xf32>
    %66 = vector.broadcast %65 : vector<1x32xf32> to vector<24x32xf32>
    %67 = arith.addf %63, %66 : vector<24x32xf32>
    %68 = arith.addf %6, %67 : vector<24x32xf32>
    %c0_27 = arith.constant 0 : index
    %c0_28 = arith.constant 0 : index
    %c0_29 = arith.constant 0 : index
    %69 = vector.load %arg8[%c0_27, %c0_28, %c0_29] : memref<2x1x32xf32, #tpu.memory_space<vmem>>, vector<1x1x32xf32>
    %70 = vector.shape_cast %69 : vector<1x1x32xf32> to vector<1x32xf32>
    %c0_30 = arith.constant 0 : index
    %c0_31 = arith.constant 0 : index
    %c0_32 = arith.constant 0 : index
    %71 = vector.load %arg9[%c0_30, %c0_31, %c0_32] : memref<2x1x32xf32, #tpu.memory_space<vmem>>, vector<1x1x32xf32>
    %72 = vector.shape_cast %71 : vector<1x1x32xf32> to vector<1x32xf32>
    %cst_33 = arith.constant dense<0.000000e+00> : vector<24xf32>
    %73 = vector.multi_reduction <add>, %68, %cst_33 [1] : vector<24x32xf32> to vector<24xf32>
    %74 = vector.shape_cast %73 : vector<24xf32> to vector<24x1xf32>
    %cst_34 = arith.constant 3.200000e+01 : f32
    %75 = vector.broadcast %cst_34 : f32 to vector<24x1xf32>
    %76 = arith.divf %74, %75 : vector<24x1xf32>
    %77 = vector.broadcast %76 : vector<24x1xf32> to vector<24x32xf32>
    %78 = arith.subf %68, %77 : vector<24x32xf32>
    %79 = arith.mulf %78, %78 : vector<24x32xf32>
    %cst_35 = arith.constant dense<0.000000e+00> : vector<24xf32>
    %80 = vector.multi_reduction <add>, %79, %cst_35 [1] : vector<24x32xf32> to vector<24xf32>
    %81 = vector.shape_cast %80 : vector<24xf32> to vector<24x1xf32>
    %cst_36 = arith.constant 3.200000e+01 : f32
    %82 = vector.broadcast %cst_36 : f32 to vector<24x1xf32>
    %83 = arith.divf %81, %82 : vector<24x1xf32>
    %cst_37 = arith.constant 9.99999974E-6 : f32
    %84 = vector.broadcast %cst_37 : f32 to vector<24x1xf32>
    %85 = arith.addf %83, %84 : vector<24x1xf32>
    %86 = math.rsqrt %85 : vector<24x1xf32>
    %87 = vector.broadcast %86 : vector<24x1xf32> to vector<24x32xf32>
    %88 = arith.mulf %78, %87 : vector<24x32xf32>
    %89 = vector.broadcast %70 : vector<1x32xf32> to vector<24x32xf32>
    %90 = arith.mulf %88, %89 : vector<24x32xf32>
    %91 = vector.broadcast %72 : vector<1x32xf32> to vector<24x32xf32>
    %92 = arith.addf %90, %91 : vector<24x32xf32>
    %93 = arith.truncf %92 : vector<24x32xf32> to vector<24x32xbf16>
    %c0_38 = arith.constant 0 : index
    %c0_39 = arith.constant 0 : index
    %c0_40 = arith.constant 0 : index
    %94 = vector.load %arg10[%c0_38, %c0_39, %c0_40] : memref<2x32x64xbf16, #tpu.memory_space<vmem>>, vector<1x32x64xbf16>
    %95 = vector.shape_cast %94 : vector<1x32x64xbf16> to vector<32x64xbf16>
    %cst_41 = arith.constant dense<0.000000e+00> : vector<24x64xf32>
    %96 = tpu.matmul %93, %95, %cst_41 {dimension_numbers = #tpu.dot_dimension_numbers<[1], [0], [0], [1], [0, 0, 1, 1], [], []>} : vector<24x32xbf16>, vector<32x64xbf16>, vector<24x64xf32> -> vector<24x64xf32>
    %c0_42 = arith.constant 0 : index
    %c0_43 = arith.constant 0 : index
    %c0_44 = arith.constant 0 : index
    %97 = vector.load %arg11[%c0_42, %c0_43, %c0_44] : memref<2x1x64xf32, #tpu.memory_space<vmem>>, vector<1x1x64xf32>
    %98 = vector.shape_cast %97 : vector<1x1x64xf32> to vector<1x64xf32>
    %99 = vector.broadcast %98 : vector<1x64xf32> to vector<24x64xf32>
    %100 = arith.addf %96, %99 : vector<24x64xf32>
    %101 = arith.mulf %100, %100 : vector<24x64xf32>
    %102 = arith.mulf %100, %101 : vector<24x64xf32>
    %cst_45 = arith.constant 4.471500e-02 : f32
    %103 = vector.broadcast %cst_45 : f32 to vector<24x64xf32>
    %104 = arith.mulf %103, %102 : vector<24x64xf32>
    %105 = arith.addf %100, %104 : vector<24x64xf32>
    %cst_46 = arith.constant 0.797884583 : f32
    %106 = vector.broadcast %cst_46 : f32 to vector<24x64xf32>
    %107 = arith.mulf %106, %105 : vector<24x64xf32>
    %108 = math.tanh %107 : vector<24x64xf32>
    %cst_47 = arith.constant 1.000000e+00 : f32
    %109 = vector.broadcast %cst_47 : f32 to vector<24x64xf32>
    %110 = arith.addf %109, %108 : vector<24x64xf32>
    %cst_48 = arith.constant 5.000000e-01 : f32
    %111 = vector.broadcast %cst_48 : f32 to vector<24x64xf32>
    %112 = arith.mulf %111, %110 : vector<24x64xf32>
    %113 = arith.mulf %100, %112 : vector<24x64xf32>
    %114 = arith.truncf %113 : vector<24x64xf32> to vector<24x64xbf16>
    %c0_49 = arith.constant 0 : index
    %c0_50 = arith.constant 0 : index
    %c0_51 = arith.constant 0 : index
    %115 = vector.load %arg12[%c0_49, %c0_50, %c0_51] : memref<2x64x32xbf16, #tpu.memory_space<vmem>>, vector<1x64x32xbf16>
    %116 = vector.shape_cast %115 : vector<1x64x32xbf16> to vector<64x32xbf16>
    %cst_52 = arith.constant dense<0.000000e+00> : vector<24x32xf32>
    %117 = tpu.matmul %114, %116, %cst_52 {dimension_numbers = #tpu.dot_dimension_numbers<[1], [0], [0], [1], [0, 0, 1, 1], [], []>} : vector<24x64xbf16>, vector<64x32xbf16>, vector<24x32xf32> -> vector<24x32xf32>
    %c0_53 = arith.constant 0 : index
    %c0_54 = arith.constant 0 : index
    %c0_55 = arith.constant 0 : index
    %118 = vector.load %arg13[%c0_53, %c0_54, %c0_55] : memref<2x1x32xf32, #tpu.memory_space<vmem>>, vector<1x1x32xf32>
    %119 = vector.shape_cast %118 : vector<1x1x32xf32> to vector<1x32xf32>
    %120 = vector.broadcast %119 : vector<1x32xf32> to vector<24x32xf32>
    %121 = arith.addf %117, %120 : vector<24x32xf32>
    %122 = arith.addf %92, %121 : vector<24x32xf32>
    %c0_56 = arith.constant 0 : index
    %c0_57 = arith.constant 0 : index
    %c0_58 = arith.constant 0 : index
    %123 = vector.load %arg14[%c0_56, %c0_57, %c0_58] : memref<2x1x32xf32, #tpu.memory_space<vmem>>, vector<1x1x32xf32>
    %124 = vector.shape_cast %123 : vector<1x1x32xf32> to vector<1x32xf32>
    %c0_59 = arith.constant 0 : index
    %c0_60 = arith.constant 0 : index
    %c0_61 = arith.constant 0 : index
    %125 = vector.load %arg15[%c0_59, %c0_60, %c0_61] : memref<2x1x32xf32, #tpu.memory_space<vmem>>, vector<1x1x32xf32>
    %126 = vector.shape_cast %125 : vector<1x1x32xf32> to vector<1x32xf32>
    %cst_62 = arith.constant dense<0.000000e+00> : vector<24xf32>
    %127 = vector.multi_reduction <add>, %122, %cst_62 [1] : vector<24x32xf32> to vector<24xf32>
    %128 = vector.shape_cast %127 : vector<24xf32> to vector<24x1xf32>
    %cst_63 = arith.constant 3.200000e+01 : f32
    %129 = vector.broadcast %cst_63 : f32 to vector<24x1xf32>
    %130 = arith.divf %128, %129 : vector<24x1xf32>
    %131 = vector.broadcast %130 : vector<24x1xf32> to vector<24x32xf32>
    %132 = arith.subf %122, %131 : vector<24x32xf32>
    %133 = arith.mulf %132, %132 : vector<24x32xf32>
    %cst_64 = arith.constant dense<0.000000e+00> : vector<24xf32>
    %134 = vector.multi_reduction <add>, %133, %cst_64 [1] : vector<24x32xf32> to vector<24xf32>
    %135 = vector.shape_cast %134 : vector<24xf32> to vector<24x1xf32>
    %cst_65 = arith.constant 3.200000e+01 : f32
    %136 = vector.broadcast %cst_65 : f32 to vector<24x1xf32>
    %137 = arith.divf %135, %136 : vector<24x1xf32>
    %cst_66 = arith.constant 9.99999974E-6 : f32
    %138 = vector.broadcast %cst_66 : f32 to vector<24x1xf32>
    %139 = arith.addf %137, %138 : vector<24x1xf32>
    %140 = math.rsqrt %139 : vector<24x1xf32>
    %141 = vector.broadcast %140 : vector<24x1xf32> to vector<24x32xf32>
    %142 = arith.mulf %132, %141 : vector<24x32xf32>
    %143 = vector.broadcast %124 : vector<1x32xf32> to vector<24x32xf32>
    %144 = arith.mulf %142, %143 : vector<24x32xf32>
    %145 = vector.broadcast %126 : vector<1x32xf32> to vector<24x32xf32>
    %146 = arith.addf %144, %145 : vector<24x32xf32>
    %147 = vector.shape_cast %146 : vector<24x32xf32> to vector<1x24x32xf32>
    %c1 = arith.constant 1 : index
    %c0_67 = arith.constant 0 : index
    %c0_68 = arith.constant 0 : index
    %c0_69 = arith.constant 0 : index
    %148 = vector.load %arg16[%c1, %c0_67, %c0_68, %c0_69] : memref<3x1x24x32xf32, #tpu.memory_space<vmem>>, vector<1x1x24x32xf32>
    %149 = vector.shape_cast %148 : vector<1x1x24x32xf32> to vector<1x24x32xf32>
    %150 = vector.shape_cast %147 : vector<1x24x32xf32> to vector<1x1x24x32xf32>
    tpu.vector_store %arg16[%c1, %c0_67, %c0_68, %c0_69], %150 {strides = array<i32>} : memref<3x1x24x32xf32, #tpu.memory_space<vmem>>, vector<1x1x24x32xf32>,
    %151 = arith.truncf %146 : vector<24x32xf32> to vector<24x32xbf16>
    %c1_70 = arith.constant 1 : index
    %c0_71 = arith.constant 0 : index
    %c0_72 = arith.constant 0 : index
    %152 = vector.load %arg4[%c1_70, %c0_71, %c0_72] : memref<2x32x96xbf16, #tpu.memory_space<vmem>>, vector<1x32x96xbf16>
    %153 = vector.shape_cast %152 : vector<1x32x96xbf16> to vector<32x96xbf16>
    %cst_73 = arith.constant dense<0.000000e+00> : vector<24x96xf32>
    %154 = tpu.matmul %151, %153, %cst_73 {dimension_numbers = #tpu.dot_dimension_numbers<[1], [0], [0], [1], [0, 0, 1, 1], [], []>} : vector<24x32xbf16>, vector<32x96xbf16>, vector<24x96xf32> -> vector<24x96xf32>
    %c1_74 = arith.constant 1 : index
    %c0_75 = arith.constant 0 : index
    %c0_76 = arith.constant 0 : index
    %155 = vector.load %arg5[%c1_74, %c0_75, %c0_76] : memref<2x1x96xf32, #tpu.memory_space<vmem>>, vector<1x1x96xf32>
    %156 = vector.shape_cast %155 : vector<1x1x96xf32> to vector<1x96xf32>
    %157 = vector.broadcast %156 : vector<1x96xf32> to vector<24x96xf32>
    %158 = arith.addf %154, %157 : vector<24x96xf32>
    %159 = vector.extract_strided_slice %158 {offsets = [0, 0], sizes = [24, 16], strides = [1, 1]} : vector<24x96xf32> to vector<24x16xf32>
    %160 = vector.shape_cast %159 : vector<24x16xf32> to vector<3x8x16xf32>
    %161 = vector.extract_strided_slice %158 {offsets = [0, 16], sizes = [24, 16], strides = [1, 1]} : vector<24x96xf32> to vector<24x16xf32>
    %162 = vector.shape_cast %161 : vector<24x16xf32> to vector<3x8x16xf32>
    %163 = tpu.concatenate %160, %162 in 0 : vector<3x8x16xf32>, vector<3x8x16xf32> -> vector<6x8x16xf32>
    %164 = arith.truncf %163 : vector<6x8x16xf32> to vector<6x8x16xbf16>
    %165 = vector.extract_strided_slice %158 {offsets = [0, 32], sizes = [24, 16], strides = [1, 1]} : vector<24x96xf32> to vector<24x16xf32>
    %166 = vector.shape_cast %165 : vector<24x16xf32> to vector<3x8x16xf32>
    %167 = vector.extract_strided_slice %158 {offsets = [0, 48], sizes = [24, 16], strides = [1, 1]} : vector<24x96xf32> to vector<24x16xf32>
    %168 = vector.shape_cast %167 : vector<24x16xf32> to vector<3x8x16xf32>
    %169 = tpu.concatenate %166, %168 in 0 : vector<3x8x16xf32>, vector<3x8x16xf32> -> vector<6x8x16xf32>
    %170 = arith.truncf %169 : vector<6x8x16xf32> to vector<6x8x16xbf16>
    %171 = vector.extract_strided_slice %158 {offsets = [0, 64], sizes = [24, 16], strides = [1, 1]} : vector<24x96xf32> to vector<24x16xf32>
    %172 = vector.shape_cast %171 : vector<24x16xf32> to vector<3x8x16xf32>
    %173 = vector.extract_strided_slice %158 {offsets = [0, 80], sizes = [24, 16], strides = [1, 1]} : vector<24x96xf32> to vector<24x16xf32>
    %174 = vector.shape_cast %173 : vector<24x16xf32> to vector<3x8x16xf32>
    %175 = tpu.concatenate %172, %174 in 0 : vector<3x8x16xf32>, vector<3x8x16xf32> -> vector<6x8x16xf32>
    %176 = arith.truncf %175 : vector<6x8x16xf32> to vector<6x8x16xbf16>
    "tpu.trace_start"() <{level = 10 : i32, message = "bqd,bkd->bqk"}> : () -> ()
    %cst_77 = arith.constant dense<0.000000e+00> : vector<6x8x8xf32>
    %177 = tpu.matmul %164, %170, %cst_77 {dimension_numbers = #tpu.dot_dimension_numbers<[2], [2], [1], [1], [0, 0, 0, 1, 1, 1], [0], [0]>} : vector<6x8x16xbf16>, vector<6x8x16xbf16>, vector<6x8x8xf32> -> vector<6x8x8xf32>
    "tpu.trace_stop"() : () -> ()
    %178 = arith.addf %177, %14 : vector<6x8x8xf32>
    %cst_78 = arith.constant dense<0xFF800000> : vector<6x8xf32>
    %179 = vector.multi_reduction <maximumf>, %178, %cst_78 [2] : vector<6x8x8xf32> to vector<6x8xf32>
    %180 = vector.shape_cast %179 : vector<6x8xf32> to vector<6x8x1xf32>
    %181 = vector.broadcast %180 : vector<6x8x1xf32> to vector<6x8x8xf32>
    %182 = arith.subf %178, %181 : vector<6x8x8xf32>
    %183 = math.exp %182 : vector<6x8x8xf32>
    %cst_79 = arith.constant dense<0.000000e+00> : vector<6x8xf32>
    %184 = vector.multi_reduction <add>, %183, %cst_79 [2] : vector<6x8x8xf32> to vector<6x8xf32>
    %185 = vector.shape_cast %184 : vector<6x8xf32> to vector<6x8x1xf32>
    %186 = tpu.reciprocal %185 {approx = true} : vector<6x8x1xf32> -> vector<6x8x1xf32>
    %187 = vector.broadcast %186 : vector<6x8x1xf32> to vector<6x8x8xf32>
    %188 = arith.mulf %183, %187 : vector<6x8x8xf32>
    %189 = arith.truncf %188 : vector<6x8x8xf32> to vector<6x8x8xbf16>
    "tpu.trace_start"() <{level = 10 : i32, message = "bqk,bkd->bqd"}> : () -> ()
    %cst_80 = arith.constant dense<0.000000e+00> : vector<6x8x16xf32>
    %190 = tpu.matmul %189, %176, %cst_80 {dimension_numbers = #tpu.dot_dimension_numbers<[2], [1], [1], [2], [0, 0, 0, 1, 1, 2], [0], [0]>} : vector<6x8x8xbf16>, vector<6x8x16xbf16>, vector<6x8x16xf32> -> vector<6x8x16xf32>
    "tpu.trace_stop"() : () -> ()
    %191 = vector.extract_strided_slice %190 {offsets = [0, 0, 0], sizes = [3, 8, 16], strides = [1, 1, 1]} : vector<6x8x16xf32> to vector<3x8x16xf32>
    %192 = vector.shape_cast %191 : vector<3x8x16xf32> to vector<24x16xf32>
    %193 = vector.extract_strided_slice %190 {offsets = [3, 0, 0], sizes = [3, 8, 16], strides = [1, 1, 1]} : vector<6x8x16xf32> to vector<3x8x16xf32>
    %194 = vector.shape_cast %193 : vector<3x8x16xf32> to vector<24x16xf32>
    %195 = tpu.concatenate %192, %194 in 1 : vector<24x16xf32>, vector<24x16xf32> -> vector<24x32xf32>
    %196 = arith.truncf %195 : vector<24x32xf32> to vector<24x32xbf16>
    %c1_81 = arith.constant 1 : index
    %c0_82 = arith.constant 0 : index
    %c0_83 = arith.constant 0 : index
    %197 = vector.load %arg6[%c1_81, %c0_82, %c0_83] : memref<2x32x32xbf16, #tpu.memory_space<vmem>>, vector<1x32x32xbf16>
    %198 = vector.shape_cast %197 : vector<1x32x32xbf16> to vector<32x32xbf16>
    %cst_84 = arith.constant dense<0.000000e+00> : vector<24x32xf32>
    %199 = tpu.matmul %196, %198, %cst_84 {dimension_numbers = #tpu.dot_dimension_numbers<[1], [0], [0], [1], [0, 0, 1, 1], [], []>} : vector<24x32xbf16>, vector<32x32xbf16>, vector<24x32xf32> -> vector<24x32xf32>
    %c1_85 = arith.constant 1 : index
    %c0_86 = arith.constant 0 : index
    %c0_87 = arith.constant 0 : index
    %200 = vector.load %arg7[%c1_85, %c0_86, %c0_87] : memref<2x1x32xf32, #tpu.memory_space<vmem>>, vector<1x1x32xf32>
    %201 = vector.shape_cast %200 : vector<1x1x32xf32> to vector<1x32xf32>
    %202 = vector.broadcast %201 : vector<1x32xf32> to vector<24x32xf32>
    %203 = arith.addf %199, %202 : vector<24x32xf32>
    %204 = arith.addf %146, %203 : vector<24x32xf32>
    %c1_88 = arith.constant 1 : index
    %c0_89 = arith.constant 0 : index
    %c0_90 = arith.constant 0 : index
    %205 = vector.load %arg8[%c1_88, %c0_89, %c0_90] : memref<2x1x32xf32, #tpu.memory_space<vmem>>, vector<1x1x32xf32>
    %206 = vector.shape_cast %205 : vector<1x1x32xf32> to vector<1x32xf32>
    %c1_91 = arith.constant 1 : index
    %c0_92 = arith.constant 0 : index
    %c0_93 = arith.constant 0 : index
    %207 = vector.load %arg9[%c1_91, %c0_92, %c0_93] : memref<2x1x32xf32, #tpu.memory_space<vmem>>, vector<1x1x32xf32>
    %208 = vector.shape_cast %207 : vector<1x1x32xf32> to vector<1x32xf32>
    %cst_94 = arith.constant dense<0.000000e+00> : vector<24xf32>
    %209 = vector.multi_reduction <add>, %204, %cst_94 [1] : vector<24x32xf32> to vector<24xf32>
    %210 = vector.shape_cast %209 : vector<24xf32> to vector<24x1xf32>
    %cst_95 = arith.constant 3.200000e+01 : f32
    %211 = vector.broadcast %cst_95 : f32 to vector<24x1xf32>
    %212 = arith.divf %210, %211 : vector<24x1xf32>
    %213 = vector.broadcast %212 : vector<24x1xf32> to vector<24x32xf32>
    %214 = arith.subf %204, %213 : vector<24x32xf32>
    %215 = arith.mulf %214, %214 : vector<24x32xf32>
    %cst_96 = arith.constant dense<0.000000e+00> : vector<24xf32>
    %216 = vector.multi_reduction <add>, %215, %cst_96 [1] : vector<24x32xf32> to vector<24xf32>
    %217 = vector.shape_cast %216 : vector<24xf32> to vector<24x1xf32>
    %cst_97 = arith.constant 3.200000e+01 : f32
    %218 = vector.broadcast %cst_97 : f32 to vector<24x1xf32>
    %219 = arith.divf %217, %218 : vector<24x1xf32>
    %cst_98 = arith.constant 9.99999974E-6 : f32
    %220 = vector.broadcast %cst_98 : f32 to vector<24x1xf32>
    %221 = arith.addf %219, %220 : vector<24x1xf32>
    %222 = math.rsqrt %221 : vector<24x1xf32>
    %223 = vector.broadcast %222 : vector<24x1xf32> to vector<24x32xf32>
    %224 = arith.mulf %214, %223 : vector<24x32xf32>
    %225 = vector.broadcast %206 : vector<1x32xf32> to vector<24x32xf32>
    %226 = arith.mulf %224, %225 : vector<24x32xf32>
    %227 = vector.broadcast %208 : vector<1x32xf32> to vector<24x32xf32>
    %228 = arith.addf %226, %227 : vector<24x32xf32>
    %229 = arith.truncf %228 : vector<24x32xf32> to vector<24x32xbf16>
    %c1_99 = arith.constant 1 : index
    %c0_100 = arith.constant 0 : index
    %c0_101 = arith.constant 0 : index
    %230 = vector.load %arg10[%c1_99, %c0_100, %c0_101] : memref<2x32x64xbf16, #tpu.memory_space<vmem>>, vector<1x32x64xbf16>
    %231 = vector.shape_cast %230 : vector<1x32x64xbf16> to vector<32x64xbf16>
    %cst_102 = arith.constant dense<0.000000e+00> : vector<24x64xf32>
    %232 = tpu.matmul %229, %231, %cst_102 {dimension_numbers = #tpu.dot_dimension_numbers<[1], [0], [0], [1], [0, 0, 1, 1], [], []>} : vector<24x32xbf16>, vector<32x64xbf16>, vector<24x64xf32> -> vector<24x64xf32>
    %c1_103 = arith.constant 1 : index
    %c0_104 = arith.constant 0 : index
    %c0_105 = arith.constant 0 : index
    %233 = vector.load %arg11[%c1_103, %c0_104, %c0_105] : memref<2x1x64xf32, #tpu.memory_space<vmem>>, vector<1x1x64xf32>
    %234 = vector.shape_cast %233 : vector<1x1x64xf32> to vector<1x64xf32>
    %235 = vector.broadcast %234 : vector<1x64xf32> to vector<24x64xf32>
    %236 = arith.addf %232, %235 : vector<24x64xf32>
    %237 = arith.mulf %236, %236 : vector<24x64xf32>
    %238 = arith.mulf %236, %237 : vector<24x64xf32>
    %cst_106 = arith.constant 4.471500e-02 : f32
    %239 = vector.broadcast %cst_106 : f32 to vector<24x64xf32>
    %240 = arith.mulf %239, %238 : vector<24x64xf32>
    %241 = arith.addf %236, %240 : vector<24x64xf32>
    %cst_107 = arith.constant 0.797884583 : f32
    %242 = vector.broadcast %cst_107 : f32 to vector<24x64xf32>
    %243 = arith.mulf %242, %241 : vector<24x64xf32>
    %244 = math.tanh %243 : vector<24x64xf32>
    %cst_108 = arith.constant 1.000000e+00 : f32
    %245 = vector.broadcast %cst_108 : f32 to vector<24x64xf32>
    %246 = arith.addf %245, %244 : vector<24x64xf32>
    %cst_109 = arith.constant 5.000000e-01 : f32
    %247 = vector.broadcast %cst_109 : f32 to vector<24x64xf32>
    %248 = arith.mulf %247, %246 : vector<24x64xf32>
    %249 = arith.mulf %236, %248 : vector<24x64xf32>
    %250 = arith.truncf %249 : vector<24x64xf32> to vector<24x64xbf16>
    %c1_110 = arith.constant 1 : index
    %c0_111 = arith.constant 0 : index
    %c0_112 = arith.constant 0 : index
    %251 = vector.load %arg12[%c1_110, %c0_111, %c0_112] : memref<2x64x32xbf16, #tpu.memory_space<vmem>>, vector<1x64x32xbf16>
    %252 = vector.shape_cast %251 : vector<1x64x32xbf16> to vector<64x32xbf16>
    %cst_113 = arith.constant dense<0.000000e+00> : vector<24x32xf32>
    %253 = tpu.matmul %250, %252, %cst_113 {dimension_numbers = #tpu.dot_dimension_numbers<[1], [0], [0], [1], [0, 0, 1, 1], [], []>} : vector<24x64xbf16>, vector<64x32xbf16>, vector<24x32xf32> -> vector<24x32xf32>
    %c1_114 = arith.constant 1 : index
    %c0_115 = arith.constant 0 : index
    %c0_116 = arith.constant 0 : index
    %254 = vector.load %arg13[%c1_114, %c0_115, %c0_116] : memref<2x1x32xf32, #tpu.memory_space<vmem>>, vector<1x1x32xf32>
    %255 = vector.shape_cast %254 : vector<1x1x32xf32> to vector<1x32xf32>
    %256 = vector.broadcast %255 : vector<1x32xf32> to vector<24x32xf32>
    %257 = arith.addf %253, %256 : vector<24x32xf32>
    %258 = arith.addf %228, %257 : vector<24x32xf32>
    %c1_117 = arith.constant 1 : index
    %c0_118 = arith.constant 0 : index
    %c0_119 = arith.constant 0 : index
    %259 = vector.load %arg14[%c1_117, %c0_118, %c0_119] : memref<2x1x32xf32, #tpu.memory_space<vmem>>, vector<1x1x32xf32>
    %260 = vector.shape_cast %259 : vector<1x1x32xf32> to vector<1x32xf32>
    %c1_120 = arith.constant 1 : index
    %c0_121 = arith.constant 0 : index
    %c0_122 = arith.constant 0 : index
    %261 = vector.load %arg15[%c1_120, %c0_121, %c0_122] : memref<2x1x32xf32, #tpu.memory_space<vmem>>, vector<1x1x32xf32>
    %262 = vector.shape_cast %261 : vector<1x1x32xf32> to vector<1x32xf32>
    %cst_123 = arith.constant dense<0.000000e+00> : vector<24xf32>
    %263 = vector.multi_reduction <add>, %258, %cst_123 [1] : vector<24x32xf32> to vector<24xf32>
    %264 = vector.shape_cast %263 : vector<24xf32> to vector<24x1xf32>
    %cst_124 = arith.constant 3.200000e+01 : f32
    %265 = vector.broadcast %cst_124 : f32 to vector<24x1xf32>
    %266 = arith.divf %264, %265 : vector<24x1xf32>
    %267 = vector.broadcast %266 : vector<24x1xf32> to vector<24x32xf32>
    %268 = arith.subf %258, %267 : vector<24x32xf32>
    %269 = arith.mulf %268, %268 : vector<24x32xf32>
    %cst_125 = arith.constant dense<0.000000e+00> : vector<24xf32>
    %270 = vector.multi_reduction <add>, %269, %cst_125 [1] : vector<24x32xf32> to vector<24xf32>
    %271 = vector.shape_cast %270 : vector<24xf32> to vector<24x1xf32>
    %cst_126 = arith.constant 3.200000e+01 : f32
    %272 = vector.broadcast %cst_126 : f32 to vector<24x1xf32>
    %273 = arith.divf %271, %272 : vector<24x1xf32>
    %cst_127 = arith.constant 9.99999974E-6 : f32
    %274 = vector.broadcast %cst_127 : f32 to vector<24x1xf32>
    %275 = arith.addf %273, %274 : vector<24x1xf32>
    %276 = math.rsqrt %275 : vector<24x1xf32>
    %277 = vector.broadcast %276 : vector<24x1xf32> to vector<24x32xf32>
    %278 = arith.mulf %268, %277 : vector<24x32xf32>
    %279 = vector.broadcast %260 : vector<1x32xf32> to vector<24x32xf32>
    %280 = arith.mulf %278, %279 : vector<24x32xf32>
    %281 = vector.broadcast %262 : vector<1x32xf32> to vector<24x32xf32>
    %282 = arith.addf %280, %281 : vector<24x32xf32>
    %283 = vector.shape_cast %282 : vector<24x32xf32> to vector<1x24x32xf32>
    %c2 = arith.constant 2 : index
    %c0_128 = arith.constant 0 : index
    %c0_129 = arith.constant 0 : index
    %c0_130 = arith.constant 0 : index
    %284 = vector.load %arg16[%c2, %c0_128, %c0_129, %c0_130] : memref<3x1x24x32xf32, #tpu.memory_space<vmem>>, vector<1x1x24x32xf32>
    %285 = vector.shape_cast %284 : vector<1x1x24x32xf32> to vector<1x24x32xf32>
    %286 = vector.shape_cast %283 : vector<1x24x32xf32> to vector<1x1x24x32xf32>
    tpu.vector_store %arg16[%c2, %c0_128, %c0_129, %c0_130], %286 {strides = array<i32>} : memref<3x1x24x32xf32, #tpu.memory_space<vmem>>, vector<1x1x24x32xf32>,
    return
  }
  func.func @transform_0(%arg0: i32) -> (i32, i32) {
    %c0_i32 = arith.constant 0 : i32
    %c0_i32_0 = arith.constant 0 : i32
    return %arg0, %c0_i32 : i32, i32
  }
  func.func @transform_1(%arg0: i32) -> (i32, i32) {
    %c0_i32 = arith.constant 0 : i32
    %c0_i32_0 = arith.constant 0 : i32
    %c0_i32_1 = arith.constant 0 : i32
    return %c0_i32, %c0_i32_0 : i32, i32
  }
  func.func @transform_2(%arg0: i32) -> (i32, i32, i32) {
    %c0_i32 = arith.constant 0 : i32
    %c0_i32_0 = arith.constant 0 : i32
    %c0_i32_1 = arith.constant 0 : i32
    return %arg0, %c0_i32, %c0_i32_0 : i32, i32, i32
  }
  func.func @transform_3(%arg0: i32) -> (i32, i32, i32) {
    %c0_i32 = arith.constant 0 : i32
    %c0_i32_0 = arith.constant 0 : i32
    %c0_i32_1 = arith.constant 0 : i32
    %c0_i32_2 = arith.constant 0 : i32
    return %c0_i32, %c0_i32_0, %c0_i32_1 : i32, i32, i32
  }
  func.func @transform_4(%arg0: i32) -> (i32, i32, i32) {
    %c0_i32 = arith.constant 0 : i32
    %c0_i32_0 = arith.constant 0 : i32
    %c0_i32_1 = arith.constant 0 : i32
    %c0_i32_2 = arith.constant 0 : i32
    return %c0_i32, %c0_i32_0, %c0_i32_1 : i32, i32, i32
  }
  func.func @transform_5(%arg0: i32) -> (i32, i32, i32) {
    %c0_i32 = arith.constant 0 : i32
    %c0_i32_0 = arith.constant 0 : i32
    %c0_i32_1 = arith.constant 0 : i32
    %c0_i32_2 = arith.constant 0 : i32
    return %c0_i32, %c0_i32_0, %c0_i32_1 : i32, i32, i32
  }
  func.func @transform_6(%arg0: i32) -> (i32, i32, i32) {
    %c0_i32 = arith.constant 0 : i32
    %c0_i32_0 = arith.constant 0 : i32
    %c0_i32_1 = arith.constant 0 : i32
    %c0_i32_2 = arith.constant 0 : i32
    return %c0_i32, %c0_i32_0, %c0_i32_1 : i32, i32, i32
  }
  func.func @transform_7(%arg0: i32) -> (i32, i32, i32) {
    %c0_i32 = arith.constant 0 : i32
    %c0_i32_0 = arith.constant 0 : i32
    %c0_i32_1 = arith.constant 0 : i32
    %c0_i32_2 = arith.constant 0 : i32
    return %c0_i32, %c0_i32_0, %c0_i32_1 : i32, i32, i32
  }
  func.func @transform_8(%arg0: i32) -> (i32, i32, i32) {
    %c0_i32 = arith.constant 0 : i32
    %c0_i32_0 = arith.constant 0 : i32
    %c0_i32_1 = arith.constant 0 : i32
    %c0_i32_2 = arith.constant 0 : i32
    return %c0_i32, %c0_i32_0, %c0_i32_1 : i32, i32, i32
  }
  func.func @transform_9(%arg0: i32) -> (i32, i32, i32) {
    %c0_i32 = arith.constant 0 : i32
    %c0_i32_0 = arith.constant 0 : i32
    %c0_i32_1 = arith.constant 0 : i32
    %c0_i32_2 = arith.constant 0 : i32
    return %c0_i32, %c0_i32_0, %c0_i32_1 : i32, i32, i32
  }
  func.func @transform_10(%arg0: i32) -> (i32, i32, i32) {
    %c0_i32 = arith.constant 0 : i32
    %c0_i32_0 = arith.constant 0 : i32
    %c0_i32_1 = arith.constant 0 : i32
    %c0_i32_2 = arith.constant 0 : i32
    return %c0_i32, %c0_i32_0, %c0_i32_1 : i32, i32, i32
  }
  func.func @transform_11(%arg0: i32) -> (i32, i32, i32) {
    %c0_i32 = arith.constant 0 : i32
    %c0_i32_0 = arith.constant 0 : i32
    %c0_i32_1 = arith.constant 0 : i32
    %c0_i32_2 = arith.constant 0 : i32
    return %c0_i32, %c0_i32_0, %c0_i32_1 : i32, i32, i32
  }
  func.func @transform_12(%arg0: i32) -> (i32, i32, i32) {
    %c0_i32 = arith.constant 0 : i32
    %c0_i32_0 = arith.constant 0 : i32
    %c0_i32_1 = arith.constant 0 : i32
    %c0_i32_2 = arith.constant 0 : i32
    return %c0_i32, %c0_i32_0, %c0_i32_1 : i32, i32, i32
  }
  func.func @transform_13(%arg0: i32) -> (i32, i32, i32) {
    %c0_i32 = arith.constant 0 : i32
    %c0_i32_0 = arith.constant 0 : i32
    %c0_i32_1 = arith.constant 0 : i32
    %c0_i32_2 = arith.constant 0 : i32
    return %c0_i32, %c0_i32_0, %c0_i32_1 : i32, i32, i32
  }
  func.func @transform_14(%arg0: i32) -> (i32, i32, i32) {
    %c0_i32 = arith.constant 0 : i32
    %c0_i32_0 = arith.constant 0 : i32
    %c0_i32_1 = arith.constant 0 : i32
    %c0_i32_2 = arith.constant 0 : i32
    return %c0_i32, %c0_i32_0, %c0_i32_1 : i32, i32, i32
  }
  func.func @transform_15(%arg0: i32) -> (i32, i32, i32, i32) {
    %c0_i32 = arith.constant 0 : i32
    %c0_i32_0 = arith.constant 0 : i32
    %c0_i32_1 = arith.constant 0 : i32
    %c0_i32_2 = arith.constant 0 : i32
    return %c0_i32, %arg0, %c0_i32_0, %c0_i32_1 : i32, i32, i32, i32
  }
}

</mosaic_0001>

<llo_original>
// kernel: forward.1
$region0: #{forward.1}
  #allocation0 [shape = 'u32[]', space=smem, size = 0x4, offset = 0x4, fixed_abs, tag = 'smem constant byte address 0x4 - core index']
  #allocation1 [shape = 'u32[72,128]{1,0:T(1,128)}', space=vmem, size = 0x9000, scoped, tag = 'internal scratch']
  #allocation4 [shape = 's32[]', space=sflag, size = 0x4, offset = 0, fixed_abs, tag = 'sflag constant byte address 0x0 - dummy sync flag']
  %s0 = inlined_call_operand.vmem [shape: f32[48,32], index: 0, kind: input, shape index: {}]
  %s1 = inlined_call_operand.vmem [shape: f32[8,32], index: 1, kind: input, shape index: {}]
  %s2 = inlined_call_operand.vmem [shape: f32[6,1,8], index: 2, kind: input, shape index: {}]
  %s3 = inlined_call_operand.vmem [shape: bf16[2,32,96], index: 3, kind: input, shape index: {}]
  %s4 = inlined_call_operand.vmem [shape: f32[2,1,96], index: 4, kind: input, shape index: {}]
  %s5 = inlined_call_operand.vmem [shape: bf16[2,32,32], index: 5, kind: input, shape index: {}]
  %s6 = inlined_call_operand.vmem [shape: f32[2,1,32], index: 6, kind: input, shape index: {}, may-alias: {6,8,12,14}]
  %s7 = inlined_call_operand.vmem [shape: f32[2,1,32], index: 7, kind: input, shape index: {}, may-alias: {7,13}]
  %s8 = inlined_call_operand.vmem [shape: f32[2,1,32], index: 8, kind: input, shape index: {}, may-alias: {6,8,12,14}]
  %s9 = inlined_call_operand.vmem [shape: bf16[2,32,64], index: 9, kind: input, shape index: {}]
  %s10 = inlined_call_operand.vmem [shape: f32[2,1,64], index: 10, kind: input, shape index: {}]
  %s11 = inlined_call_operand.vmem [shape: bf16[2,64,32], index: 11, kind: input, shape index: {}]
  %s12 = inlined_call_operand.vmem [shape: f32[2,1,32], index: 12, kind: input, shape index: {}, may-alias: {6,8,12,14}]
  %s13 = inlined_call_operand.vmem [shape: f32[2,1,32], index: 13, kind: input, shape index: {}, may-alias: {7,13}]
  %s14 = inlined_call_operand.vmem [shape: f32[2,1,32], index: 14, kind: input, shape index: {}, may-alias: {6,8,12,14}]
  %s15 = inlined_call_operand.hbm [shape: f32[3,2,24,32], index: 15, kind: output, shape index: {}]
  %s16 = sld [smem:[#allocation0]]
  $region93: #{forward.1} parent=0
    _
  %s18 = ssub.s32 1, %s16
  %s19 = scalar_select 0, %s18, %s16
  $region1: #{forward.1} parent=0
    #allocation2 [shape = 'u8[73728]{0}', space=vmem, size = 0x12000, scoped, tag = 'output window, operand 0']
    #allocation3 [shape = 's32[2]{0}', space=sflag, size = 0x8, scoped, tag = 'scoped memory for forward.1']
    %20 = vsyncpa [#allocation3], 0
    %s21 = scalar_lea.sflag [#allocation3], 1
    %22 = vsyncpa %s21, 0
    loop: start=0, step=1, limit=4
    $region2: #{forward.1} parent=1 // loop_pre_header
      _
    $region3: #{forward.1} parent=1 // loop_header
      %s24 = sphi 0, %s28
      %p25 = scmp.ge.s32.totalorder %s24, 4
      %s34 = sphi 0, %s36
      %s37 = sphi 0, %s34
      %s38 = sphi 0, %s37
      %s54 = sphi 0, %s38
      %s58 = sphi 0, %s58
      %s60 = sphi 0, %s58
      %s61 = sphi 0, %s60
      %s75 = sphi 0, %s61
      %s81 = sphi 0, %s83
      %s84 = sphi 0, %s81
      %s85 = sphi 0, %s84
      %s101 = sphi 0, %s85
      %s105 = sphi 0, %s105
      %s107 = sphi 0, %s105
      %s108 = sphi 0, %s107
      %s122 = sphi 0, %s108
      %s126 = sphi 0, %s126
      %s128 = sphi 0, %s126
      %s129 = sphi 0, %s128
      %s143 = sphi 0, %s129
      %s147 = sphi 0, %s147
      %s149 = sphi 0, %s147
      %s150 = sphi 0, %s149
      %s164 = sphi 0, %s150
      %s168 = sphi 0, %s168
      %s170 = sphi 0, %s168
      %s171 = sphi 0, %s170
      %s185 = sphi 0, %s171
      %s189 = sphi 0, %s189
      %s191 = sphi 0, %s189
      %s192 = sphi 0, %s191
      %s206 = sphi 0, %s192
      %s210 = sphi 0, %s210
      %s212 = sphi 0, %s210
      %s213 = sphi 0, %s212
      %s227 = sphi 0, %s213
      %s231 = sphi 0, %s231
      %s233 = sphi 0, %s231
      %s234 = sphi 0, %s233
      %s248 = sphi 0, %s234
      %s252 = sphi 0, %s252
      %s254 = sphi 0, %s252
      %s255 = sphi 0, %s254
      %s269 = sphi 0, %s255
      %s273 = sphi 0, %s273
      %s275 = sphi 0, %s273
      %s276 = sphi 0, %s275
      %s290 = sphi 0, %s276
      %s294 = sphi 0, %s294
      %s296 = sphi 0, %s294
      %s297 = sphi 0, %s296
      %s311 = sphi 0, %s297
      %s315 = sphi 0, %s315
      %s317 = sphi 0, %s315
      %s318 = sphi 0, %s317
      %s332 = sphi 0, %s318
      %s336 = sphi 0, %s336
      %s338 = sphi 0, %s336
      %s339 = sphi 0, %s338
      %s353 = sphi 0, %s339
      %s359 = sphi 0, %s361
      %s362 = sphi 0, %s359
      %s363 = sphi 0, %s362
      %s379 = sphi 0, %s363
    $region4: #{forward.1} parent=1 // loop_header_branch
      %27 = sbr.rel (%p25) target = $region8
    $region5: #{forward.1} parent=1 // loop_body
      %s29 = ssub.s32 %s24, 1
      %s30 = ssub.s32 %s24, 2
      %s31 = sadd.s32 %s24, 1
      %s32 = ssub.s32 %s24, %s31
      %p33 = scmp.eq.s32.totalorder %s32, 0
      %s35 = sadd.s32 %s34, 1
      %s36 = scalar_select %p33, %s34, %s35
      %p39 = pneg %p33
      %p40 = scmp.eq.s32.totalorder %s24, 1
      %p41 = por %p39, %p40
      %p42 = scmp.ne.s32.totalorder %s34, %s37
      %p43 = scmp.eq.s32.totalorder %s24, 0
      %p44 = por %p42, %p43
      %p45 = scmp.ne.s32.totalorder %s34, %s37
      %p46 = scmp.eq.s32.totalorder %s29, 1
      %p47 = por %p45, %p46
      %p48 = scmp.ne.s32.totalorder %s37, %s38
      %p49 = scmp.eq.s32.totalorder %s29, 0
      %p50 = por %p48, %p49
      %p51 = scmp.ne.s32.totalorder %s37, %s38
      %p52 = scmp.eq.s32.totalorder %s30, 1
      %p53 = por %p51, %p52
      %p55 = scmp.ne.s32.totalorder %s38, %s54
      %p56 = scmp.eq.s32.totalorder %s30, 0
      %p57 = por %p55, %p56
      %s59 = sadd.s32 %s58, 1
      %p62 = scmp.eq.s32.totalorder %s24, 1
      %p63 = scmp.ne.s32.totalorder %s58, %s60
      %p64 = scmp.eq.s32.totalorder %s24, 0
      %p65 = por %p63, %p64
      %p66 = scmp.ne.s32.totalorder %s58, %s60
      %p67 = scmp.eq.s32.totalorder %s29, 1
      %p68 = por %p66, %p67
      %p69 = scmp.ne.s32.totalorder %s60, %s61
      %p70 = scmp.eq.s32.totalorder %s29, 0
      %p71 = por %p69, %p70
      %p72 = scmp.ne.s32.totalorder %s60, %s61
      %p73 = scmp.eq.s32.totalorder %s30, 1
      %p74 = por %p72, %p73
      %p76 = scmp.ne.s32.totalorder %s61, %s75
      %p77 = scmp.eq.s32.totalorder %s30, 0
      %p78 = por %p76, %p77
      %s79 = ssub.s32 %s24, %s31
      %p80 = scmp.eq.s32.totalorder %s79, 0
      %s82 = sadd.s32 %s81, 1
      %s83 = scalar_select %p80, %s81, %s82
      %p86 = pneg %p80
      %p87 = scmp.eq.s32.totalorder %s24, 1
      %p88 = por %p86, %p87
      %p89 = scmp.ne.s32.totalorder %s81, %s84
      %p90 = scmp.eq.s32.totalorder %s24, 0
      %p91 = por %p89, %p90
      %p92 = scmp.ne.s32.totalorder %s81, %s84
      %p93 = scmp.eq.s32.totalorder %s29, 1
      %p94 = por %p92, %p93
      %p95 = scmp.ne.s32.totalorder %s84, %s85
      %p96 = scmp.eq.s32.totalorder %s29, 0
      %p97 = por %p95, %p96
      %p98 = scmp.ne.s32.totalorder %s84, %s85
      %p99 = scmp.eq.s32.totalorder %s30, 1
      %p100 = por %p98, %p99
      %p102 = scmp.ne.s32.totalorder %s85, %s101
      %p103 = scmp.eq.s32.totalorder %s30, 0
      %p104 = por %p102, %p103
      %s106 = sadd.s32 %s105, 1
      %p109 = scmp.eq.s32.totalorder %s24, 1
      %p110 = scmp.ne.s32.totalorder %s105, %s107
      %p111 = scmp.eq.s32.totalorder %s24, 0
      %p112 = por %p110, %p111
      %p113 = scmp.ne.s32.totalorder %s105, %s107
      %p114 = scmp.eq.s32.totalorder %s29, 1
      %p115 = por %p113, %p114
      %p116 = scmp.ne.s32.totalorder %s107, %s108
      %p117 = scmp.eq.s32.totalorder %s29, 0
      %p118 = por %p116, %p117
      %p119 = scmp.ne.s32.totalorder %s107, %s108
      %p120 = scmp.eq.s32.totalorder %s30, 1
      %p121 = por %p119, %p120
      %p123 = scmp.ne.s32.totalorder %s108, %s122
      %p124 = scmp.eq.s32.totalorder %s30, 0
      %p125 = por %p123, %p124
      %s127 = sadd.s32 %s126, 1
      %p130 = scmp.eq.s32.totalorder %s24, 1
      %p131 = scmp.ne.s32.totalorder %s126, %s128
      %p132 = scmp.eq.s32.totalorder %s24, 0
      %p133 = por %p131, %p132
      %p134 = scmp.ne.s32.totalorder %s126, %s128
      %p135 = scmp.eq.s32.totalorder %s29, 1
      %p136 = por %p134, %p135
      %p137 = scmp.ne.s32.totalorder %s128, %s129
      %p138 = scmp.eq.s32.totalorder %s29, 0
      %p139 = por %p137, %p138
      %p140 = scmp.ne.s32.totalorder %s128, %s129
      %p141 = scmp.eq.s32.totalorder %s30, 1
      %p142 = por %p140, %p141
      %p144 = scmp.ne.s32.totalorder %s129, %s143
      %p145 = scmp.eq.s32.totalorder %s30, 0
      %p146 = por %p144, %p145
      %s148 = sadd.s32 %s147, 1
      %p151 = scmp.eq.s32.totalorder %s24, 1
      %p152 = scmp.ne.s32.totalorder %s147, %s149
      %p153 = scmp.eq.s32.totalorder %s24, 0
      %p154 = por %p152, %p153
      %p155 = scmp.ne.s32.totalorder %s147, %s149
      %p156 = scmp.eq.s32.totalorder %s29, 1
      %p157 = por %p155, %p156
      %p158 = scmp.ne.s32.totalorder %s149, %s150
      %p159 = scmp.eq.s32.totalorder %s29, 0
      %p160 = por %p158, %p159
      %p161 = scmp.ne.s32.totalorder %s149, %s150
      %p162 = scmp.eq.s32.totalorder %s30, 1
      %p163 = por %p161, %p162
      %p165 = scmp.ne.s32.totalorder %s150, %s164
      %p166 = scmp.eq.s32.totalorder %s30, 0
      %p167 = por %p165, %p166
      %s169 = sadd.s32 %s168, 1
      %p172 = scmp.eq.s32.totalorder %s24, 1
      %p173 = scmp.ne.s32.totalorder %s168, %s170
      %p174 = scmp.eq.s32.totalorder %s24, 0
      %p175 = por %p173, %p174
      %p176 = scmp.ne.s32.totalorder %s168, %s170
      %p177 = scmp.eq.s32.totalorder %s29, 1
      %p178 = por %p176, %p177
      %p179 = scmp.ne.s32.totalorder %s170, %s171
      %p180 = scmp.eq.s32.totalorder %s29, 0
      %p181 = por %p179, %p180
      %p182 = scmp.ne.s32.totalorder %s170, %s171
      %p183 = scmp.eq.s32.totalorder %s30, 1
      %p184 = por %p182, %p183
      %p186 = scmp.ne.s32.totalorder %s171, %s185
      %p187 = scmp.eq.s32.totalorder %s30, 0
      %p188 = por %p186, %p187
      %s190 = sadd.s32 %s189, 1
      %p193 = scmp.eq.s32.totalorder %s24, 1
      %p194 = scmp.ne.s32.totalorder %s189, %s191
      %p195 = scmp.eq.s32.totalorder %s24, 0
      %p196 = por %p194, %p195
      %p197 = scmp.ne.s32.totalorder %s189, %s191
      %p198 = scmp.eq.s32.totalorder %s29, 1
      %p199 = por %p197, %p198
      %p200 = scmp.ne.s32.totalorder %s191, %s192
      %p201 = scmp.eq.s32.totalorder %s29, 0
      %p202 = por %p200, %p201
      %p203 = scmp.ne.s32.totalorder %s191, %s192
      %p204 = scmp.eq.s32.totalorder %s30, 1
      %p205 = por %p203, %p204
      %p207 = scmp.ne.s32.totalorder %s192, %s206
      %p208 = scmp.eq.s32.totalorder %s30, 0
      %p209 = por %p207, %p208
      %s211 = sadd.s32 %s210, 1
      %p214 = scmp.eq.s32.totalorder %s24, 1
      %p215 = scmp.ne.s32.totalorder %s210, %s212
      %p216 = scmp.eq.s32.totalorder %s24, 0
      %p217 = por %p215, %p216
      %p218 = scmp.ne.s32.totalorder %s210, %s212
      %p219 = scmp.eq.s32.totalorder %s29, 1
      %p220 = por %p218, %p219
      %p221 = scmp.ne.s32.totalorder %s212, %s213
      %p222 = scmp.eq.s32.totalorder %s29, 0
      %p223 = por %p221, %p222
      %p224 = scmp.ne.s32.totalorder %s212, %s213
      %p225 = scmp.eq.s32.totalorder %s30, 1
      %p226 = por %p224, %p225
      %p228 = scmp.ne.s32.totalorder %s213, %s227
      %p229 = scmp.eq.s32.totalorder %s30, 0
      %p230 = por %p228, %p229
      %s232 = sadd.s32 %s231, 1
      %p235 = scmp.eq.s32.totalorder %s24, 1
      %p236 = scmp.ne.s32.totalorder %s231, %s233
      %p237 = scmp.eq.s32.totalorder %s24, 0
      %p238 = por %p236, %p237
      %p239 = scmp.ne.s32.totalorder %s231, %s233
      %p240 = scmp.eq.s32.totalorder %s29, 1
      %p241 = por %p239, %p240
      %p242 = scmp.ne.s32.totalorder %s233, %s234
      %p243 = scmp.eq.s32.totalorder %s29, 0
      %p244 = por %p242, %p243
      %p245 = scmp.ne.s32.totalorder %s233, %s234
      %p246 = scmp.eq.s32.totalorder %s30, 1
      %p247 = por %p245, %p246
      %p249 = scmp.ne.s32.totalorder %s234, %s248
      %p250 = scmp.eq.s32.totalorder %s30, 0
      %p251 = por %p249, %p250
      %s253 = sadd.s32 %s252, 1
      %p256 = scmp.eq.s32.totalorder %s24, 1
      %p257 = scmp.ne.s32.totalorder %s252, %s254
      %p258 = scmp.eq.s32.totalorder %s24, 0
      %p259 = por %p257, %p258
      %p260 = scmp.ne.s32.totalorder %s252, %s254
      %p261 = scmp.eq.s32.totalorder %s29, 1
      %p262 = por %p260, %p261
      %p263 = scmp.ne.s32.totalorder %s254, %s255
      %p264 = scmp.eq.s32.totalorder %s29, 0
      %p265 = por %p263, %p264
      %p266 = scmp.ne.s32.totalorder %s254, %s255
      %p267 = scmp.eq.s32.totalorder %s30, 1
      %p268 = por %p266, %p267
      %p270 = scmp.ne.s32.totalorder %s255, %s269
      %p271 = scmp.eq.s32.totalorder %s30, 0
      %p272 = por %p270, %p271
      %s274 = sadd.s32 %s273, 1
      %p277 = scmp.eq.s32.totalorder %s24, 1
      %p278 = scmp.ne.s32.totalorder %s273, %s275
      %p279 = scmp.eq.s32.totalorder %s24, 0
      %p280 = por %p278, %p279
      %p281 = scmp.ne.s32.totalorder %s273, %s275
      %p282 = scmp.eq.s32.totalorder %s29, 1
      %p283 = por %p281, %p282
      %p284 = scmp.ne.s32.totalorder %s275, %s276
      %p285 = scmp.eq.s32.totalorder %s29, 0
      %p286 = por %p284, %p285
      %p287 = scmp.ne.s32.totalorder %s275, %s276
      %p288 = scmp.eq.s32.totalorder %s30, 1
      %p289 = por %p287, %p288
      %p291 = scmp.ne.s32.totalorder %s276, %s290
      %p292 = scmp.eq.s32.totalorder %s30, 0
      %p293 = por %p291, %p292
      %s295 = sadd.s32 %s294, 1
      %p298 = scmp.eq.s32.totalorder %s24, 1
      %p299 = scmp.ne.s32.totalorder %s294, %s296
      %p300 = scmp.eq.s32.totalorder %s24, 0
      %p301 = por %p299, %p300
      %p302 = scmp.ne.s32.totalorder %s294, %s296
      %p303 = scmp.eq.s32.totalorder %s29, 1
      %p304 = por %p302, %p303
      %p305 = scmp.ne.s32.totalorder %s296, %s297
      %p306 = scmp.eq.s32.totalorder %s29, 0
      %p307 = por %p305, %p306
      %p308 = scmp.ne.s32.totalorder %s296, %s297
      %p309 = scmp.eq.s32.totalorder %s30, 1
      %p310 = por %p308, %p309
      %p312 = scmp.ne.s32.totalorder %s297, %s311
      %p313 = scmp.eq.s32.totalorder %s30, 0
      %p314 = por %p312, %p313
      %s316 = sadd.s32 %s315, 1
      %p319 = scmp.eq.s32.totalorder %s24, 1
      %p320 = scmp.ne.s32.totalorder %s315, %s317
      %p321 = scmp.eq.s32.totalorder %s24, 0
      %p322 = por %p320, %p321
      %p323 = scmp.ne.s32.totalorder %s315, %s317
      %p324 = scmp.eq.s32.totalorder %s29, 1
      %p325 = por %p323, %p324
      %p326 = scmp.ne.s32.totalorder %s317, %s318
      %p327 = scmp.eq.s32.totalorder %s29, 0
      %p328 = por %p326, %p327
      %p329 = scmp.ne.s32.totalorder %s317, %s318
      %p330 = scmp.eq.s32.totalorder %s30, 1
      %p331 = por %p329, %p330
      %p333 = scmp.ne.s32.totalorder %s318, %s332
      %p334 = scmp.eq.s32.totalorder %s30, 0
      %p335 = por %p333, %p334
      %s337 = sadd.s32 %s336, 1
      %p340 = scmp.eq.s32.totalorder %s24, 1
      %p341 = scmp.ne.s32.totalorder %s336, %s338
      %p342 = scmp.eq.s32.totalorder %s24, 0
      %p343 = por %p341, %p342
      %p344 = scmp.ne.s32.totalorder %s336, %s338
      %p345 = scmp.eq.s32.totalorder %s29, 1
      %p346 = por %p344, %p345
      %p347 = scmp.ne.s32.totalorder %s338, %s339
      %p348 = scmp.eq.s32.totalorder %s29, 0
      %p349 = por %p347, %p348
      %p350 = scmp.ne.s32.totalorder %s338, %s339
      %p351 = scmp.eq.s32.totalorder %s30, 1
      %p352 = por %p350, %p351
      %p354 = scmp.ne.s32.totalorder %s339, %s353
      %p355 = scmp.eq.s32.totalorder %s30, 0
      %p356 = por %p354, %p355
      %s357 = ssub.s32 %s24, %s31
      %p358 = scmp.eq.s32.totalorder %s357, 0
      %s360 = sadd.s32 %s359, 1
      %s361 = scalar_select %p358, %s359, %s360
      %p364 = pneg %p358
      %p365 = scmp.eq.s32.totalorder %s24, 1
      %p366 = por %p364, %p365
      %p367 = scmp.ne.s32.totalorder %s359, %s362
      %p368 = scmp.eq.s32.totalorder %s24, 0
      %p369 = por %p367, %p368
      %p370 = scmp.ne.s32.totalorder %s359, %s362
      %p371 = scmp.eq.s32.totalorder %s29, 1
      %p372 = por %p370, %p371
      %p373 = scmp.ne.s32.totalorder %s362, %s363
      %p374 = scmp.eq.s32.totalorder %s29, 0
      %p375 = por %p373, %p374
      %p376 = scmp.ne.s32.totalorder %s362, %s363
      %p377 = scmp.eq.s32.totalorder %s30, 1
      %p378 = por %p376, %p377
      %p380 = scmp.ne.s32.totalorder %s363, %s379
      %p381 = scmp.eq.s32.totalorder %s30, 0
      %p382 = por %p380, %p381
      %p383 = scmp.le.s32.totalorder 1, %s24
      %p384 = scmp.lt.s32.totalorder %s24, 3
      %p385 = pnand %p383, %p384
      %p386 = pneg %p385
      // Predicated region
      $region9: #{forward.1} parent=5 // pred_check
        _
      $region10: #{forward.1} parent=5 // pred_check_branch
        %388 = sbr.rel (%p385) target = $region12
      $region11: #{forward.1} parent=5 // pred_region
        %s389 = ssub.s32 %s24, 1
        // Predicated region
        $region13: #{forward.1} parent=11 // pred_check
          %p390 = pneg %p71
        $region14: #{forward.1} parent=11 // pred_check_branch
          %392 = sbr.rel (%p390) target = $region16
        $region15: #{forward.1} parent=11 // pred_region
          _
        $region16: #{forward.1} parent=11 // pred_fallthru
          _
        // Predicated region
        $region17: #{forward.1} parent=11 // pred_check
          %p393 = pneg %p118
        $region18: #{forward.1} parent=11 // pred_check_branch
          %395 = sbr.rel (%p393) target = $region20
        $region19: #{forward.1} parent=11 // pred_region
          _
        $region20: #{forward.1} parent=11 // pred_fallthru
          _
        // Predicated region
        $region21: #{forward.1} parent=11 // pred_check
          %p396 = pneg %p139
        $region22: #{forward.1} parent=11 // pred_check_branch
          %398 = sbr.rel (%p396) target = $region24
        $region23: #{forward.1} parent=11 // pred_region
          _
        $region24: #{forward.1} parent=11 // pred_fallthru
          _
        // Predicated region
        $region25: #{forward.1} parent=11 // pred_check
          %p399 = pneg %p160
        $region26: #{forward.1} parent=11 // pred_check_branch
          %401 = sbr.rel (%p399) target = $region28
        $region27: #{forward.1} parent=11 // pred_region
          _
        $region28: #{forward.1} parent=11 // pred_fallthru
          _
        // Predicated region
        $region29: #{forward.1} parent=11 // pred_check
          %p402 = pneg %p181
        $region30: #{forward.1} parent=11 // pred_check_branch
          %404 = sbr.rel (%p402) target = $region32
        $region31: #{forward.1} parent=11 // pred_region
          _
        $region32: #{forward.1} parent=11 // pred_fallthru
          _
        // Predicated region
        $region33: #{forward.1} parent=11 // pred_check
          %p405 = pneg %p202
        $region34: #{forward.1} parent=11 // pred_check_branch
          %407 = sbr.rel (%p405) target = $region36
        $region35: #{forward.1} parent=11 // pred_region
          _
        $region36: #{forward.1} parent=11 // pred_fallthru
          _
        // Predicated region
        $region37: #{forward.1} parent=11 // pred_check
          %p408 = pneg %p223
        $region38: #{forward.1} parent=11 // pred_check_branch
          %410 = sbr.rel (%p408) target = $region40
        $region39: #{forward.1} parent=11 // pred_region
          _
        $region40: #{forward.1} parent=11 // pred_fallthru
          _
        // Predicated region
        $region41: #{forward.1} parent=11 // pred_check
          %p411 = pneg %p244
        $region42: #{forward.1} parent=11 // pred_check_branch
          %413 = sbr.rel (%p411) target = $region44
        $region43: #{forward.1} parent=11 // pred_region
          _
        $region44: #{forward.1} parent=11 // pred_fallthru
          _
        // Predicated region
        $region45: #{forward.1} parent=11 // pred_check
          %p414 = pneg %p265
        $region46: #{forward.1} parent=11 // pred_check_branch
          %416 = sbr.rel (%p414) target = $region48
        $region47: #{forward.1} parent=11 // pred_region
          _
        $region48: #{forward.1} parent=11 // pred_fallthru
          _
        // Predicated region
        $region49: #{forward.1} parent=11 // pred_check
          %p417 = pneg %p286
        $region50: #{forward.1} parent=11 // pred_check_branch
          %419 = sbr.rel (%p417) target = $region52
        $region51: #{forward.1} parent=11 // pred_region
          _
        $region52: #{forward.1} parent=11 // pred_fallthru
          _
        // Predicated region
        $region53: #{forward.1} parent=11 // pred_check
          %p420 = pneg %p307
        $region54: #{forward.1} parent=11 // pred_check_branch
          %422 = sbr.rel (%p420) target = $region56
        $region55: #{forward.1} parent=11 // pred_region
          _
        $region56: #{forward.1} parent=11 // pred_fallthru
          _
        // Predicated region
        $region57: #{forward.1} parent=11 // pred_check
          %p423 = pneg %p328
        $region58: #{forward.1} parent=11 // pred_check_branch
          %425 = sbr.rel (%p423) target = $region60
        $region59: #{forward.1} parent=11 // pred_region
          _
        $region60: #{forward.1} parent=11 // pred_fallthru
          _
        // Predicated region
        $region61: #{forward.1} parent=11 // pred_check
          %p426 = pneg %p349
        $region62: #{forward.1} parent=11 // pred_check_branch
          %428 = sbr.rel (%p426) target = $region64
        $region63: #{forward.1} parent=11 // pred_region
          _
        $region64: #{forward.1} parent=11 // pred_fallthru
          _
      $region12: #{forward.1} parent=5 // pred_fallthru
        _
      %p429 = scmp.lt.s32.totalorder %s24, 2
      // Predicated region
      $region65: #{forward.1} parent=5 // pred_check
        %p430 = pneg %p429
      $region66: #{forward.1} parent=5 // pred_check_branch
        %432 = sbr.rel (%p430) target = $region68
      $region67: #{forward.1} parent=5 // pred_region
        // Predicated region
        $region69: #{forward.1} parent=67 // pred_check
          %p433 = pneg %p44
        $region70: #{forward.1} parent=67 // pred_check_branch
          %435 = sbr.rel (%p433) target = $region72
        $region71: #{forward.1} parent=67 // pred_region
          %s436 = smul.u32 3, %s24
          %p437 = scmp.lt.s32.totalorder %s436, 5
          %s438 = scalar_select %p437, %s436, 5
          %s439 = smul.addr %s438, 8
          %s440 = scalar_lea.vmem %s0, %s439
          %s441 = smul.u32 3, %s24
        $region72: #{forward.1} parent=67 // pred_fallthru
          _
        // Predicated region
        $region73: #{forward.1} parent=67 // pred_check
          %p442 = pneg %p91
        $region74: #{forward.1} parent=67 // pred_check_branch
          %444 = sbr.rel (%p442) target = $region76
        $region75: #{forward.1} parent=67 // pred_region
          %s445 = smul.u32 3, %s24
          %p446 = scmp.lt.s32.totalorder %s445, 5
          %s447 = scalar_select %p446, %s445, 5
          %s448 = scalar_lea.vmem %s2, %s447
          %s449 = smul.u32 3, %s24
        $region76: #{forward.1} parent=67 // pred_fallthru
          _
      $region68: #{forward.1} parent=5 // pred_fallthru
        _
      %p450 = scmp.le.s32.totalorder 1, %s24
      %p451 = scmp.lt.s32.totalorder %s24, 3
      %p452 = pnand %p450, %p451
      %p453 = pneg %p452
      // Predicated region
      $region77: #{forward.1} parent=5 // pred_check
        _
      $region78: #{forward.1} parent=5 // pred_check_branch
        %455 = sbr.rel (%p452) target = $region80
      $region79: #{forward.1} parent=5 // pred_region
        %s456 = ssub.s32 %s24, 1
        %s457 = smul.u32 3, %s29
        %p458 = scmp.lt.s32.totalorder %s457, 5
        %s459 = scalar_select %p458, %s457, 5
        %s460 = smul.addr %s459, 8
        %s461 = scalar_lea.vmem %s0, %s460
        %p462 = pneg %p50
        %p463 = pneg %p47
        %p464 = pneg %p71
        %p465 = pneg %p68
        %s466 = smul.u32 3, %s29
        %p467 = scmp.lt.s32.totalorder %s466, 5
        %s468 = scalar_select %p467, %s466, 5
        %s469 = scalar_lea.vmem %s2, %s468
        %p470 = pneg %p97
        %p471 = pneg %p94
        %p472 = pneg %p118
        %p473 = pneg %p115
        %p474 = pneg %p139
        %p475 = pneg %p136
        %p476 = pneg %p160
        %p477 = pneg %p157
        %p478 = pneg %p181
        %p479 = pneg %p178
        %p480 = pneg %p202
        %p481 = pneg %p199
        %p482 = pneg %p223
        %p483 = pneg %p220
        %p484 = pneg %p244
        %p485 = pneg %p241
        %p486 = pneg %p265
        %p487 = pneg %p262
        %p488 = pneg %p286
        %p489 = pneg %p283
        %p490 = pneg %p307
        %p491 = pneg %p304
        %p492 = pneg %p328
        %p493 = pneg %p325
        %p494 = pneg %p349
        %p495 = pneg %p346
        %p496 = pneg %p375
        %p497 = pneg %p372
        %s498 = sand.u32 %s362, 1
        %s499 = scalar_lea.sflag [#allocation3], %s498
        %s500 = sand.u32 %s362, 1
        %s501 = smul.addr %s500, 72
        %s502 = scalar_lea.vmem [#allocation2], %s501
        %s503 = smul.u32 3, %s29
        %p504 = scmp.lt.s32.totalorder %s503, 5
        %s505 = scalar_select %p504, %s503, 5
        %s506 = smul.addr %s505, 8
        %s507 = scalar_lea.vmem %s0, %s506
        %s508 = smul.u32 3, %s29
        %s509 = smul.u32 3, %s29
        %p510 = scmp.lt.s32.totalorder %s509, 5
        %s511 = scalar_select %p510, %s509, 5
        %s512 = scalar_lea.vmem %s2, %s511
        %s513 = smul.u32 3, %s29
        %v515 = vld [vmem:[%s507] sm:$0xff]
        %v516 = vld [vmem:[%s507 + $0x8] sm:$0xff]
        %v517 = vld [vmem:[%s507 + $0x10] sm:$0xff]
        %v518 = vld [vmem:[%s1] sm:$0xff]
        %v519 = vadd.f32 %v515, %v518
        %v520 = vadd.f32 %v516, %v518
        %v521 = vadd.f32 %v517, %v518
        %vm522 = vcmask 261120
        %523 = vst.msk [vmem:[%s502] sm:$0xff] %vm522, %v519
        %524 = vst.msk [vmem:[%s502 + $0x8] sm:$0xff] %vm522, %v520
        %525 = vst.msk [vmem:[%s502 + $0x10] sm:$0xff] %vm522, %v521
        %v526 = vld [vmem:[%s512] sm:$0x1]
        %v527 = vld [vmem:[%s512 + $0x1] sm:$0x1]
        %v528 = vld [vmem:[%s512 + $0x2] sm:$0x1]
        %v532 = vperm.slane %v526, 0
        %v533 = vperm.slane %v527, 0
        %v534 = vperm.slane %v528, 0
        %v538 = vpack.c.bf16 %v520, %v519
        %v539 = vpack.c.bf16 %v521, %v521
        %v540 = vld [vmem:[%s3] sm:$0xf]
        %v541 = vld [vmem:[%s3 + $0x4] sm:$0xf]
        %v542 = vld [vmem:[%s3 + $0x8] sm:$0xf]
        %v543 = vld [vmem:[%s3 + $0xc] sm:$0xf]
        %v544 = vld [vmem:[%s4] sm:$0x1]
        %v546 = vperm.slane %v544, 0
        %v552 = vunpack.c.l.b16 %v540
        %v553 = vunpack.c.l.b16 %v541
        %v554 = vunpack.c.l.b16 %v542
        %v555 = vunpack.c.l.b16 %v543
        %v556 = vpack.c.b16 %v553, %v552
        %v557 = vpack.c.b16 %v555, %v554
        %v561 = vsel %vm522, %v538, 0
        %v564 = vsel %vm522, %v539, 0
        %566 = vmatpush.bf16.msra.mxu0 0
        %567 = vmatpush.bf16.msra.mxu0 0
        %568 = vmatpush.bf16.msra.mxu0 0
        %569 = vmatpush.bf16.msra.mxu0 0
        %570 = vmatpush.bf16.msra.mxu0 0
        %571 = vmatpush.bf16.msra.mxu0 0
        %572 = vmatpush.bf16.msra.mxu0 %v557
        %573 = vmatpush.bf16.msra.mxu0 %v556
        %574 = vmatmul.bf16.gmra.mxu0 %v561
        %v575 = vpop.f32.mrf.mxu0
        %v576 = vadd.f32 %v546, %v575
        %v577 = vpop.f32.mrf.mxu0
        %v578 = vadd.f32 %v546, %v577
        %579 = vmatmul.bf16.gmra.mxu0 %v564
        %v580 = vpop.f32.mrf.mxu0
        %v581 = vadd.f32 %v546, %v580
        %v582 = vpop.f32.mrf.mxu0
        %583 = vdwg.mxu0
        %587 = vrot.lane.b32.xlu0 %v576, 112
        %v588 = vpop.permute.xlu0 %587
        %589 = vrot.lane.b32.xlu0 %v578, 112
        %v590 = vpop.permute.xlu0 %589
        %591 = vrot.lane.b32.xlu0 %v581, 112
        %v592 = vpop.permute.xlu0 %591
        %v596 = vpack.c.bf16 %v576, %v576
        %v597 = vpack.c.bf16 %v578, %v578
        %v598 = vpack.c.bf16 %v581, %v581
        %v599 = vpack.c.bf16 %v588, %v588
        %v600 = vpack.c.bf16 %v590, %v590
        %v601 = vpack.c.bf16 %v592, %v592
        %v603 = vunpack.c.l.b16 %v596
        %v604 = vpack.c.b16 %v603, %v603
        %605 = vrot.lane.b32.xlu0 %v604, 96
        %v606 = vpop.permute.xlu0 %605
        %vm607 = vcmask 130048
        %v609 = vsel %vm607, %v596, 0
        %v612 = vsel %vm607, %v606, 0
        %614 = vmatpush.bf16.xpose.msra.mxu0 0
        %615 = vmatpush.bf16.xpose.msra.mxu0 0
        %616 = vmatpush.bf16.xpose.msra.mxu0 0
        %617 = vmatpush.bf16.xpose.msra.mxu0 0
        %618 = vmatpush.bf16.xpose.msra.mxu0 0
        %619 = vmatpush.bf16.xpose.msra.mxu0 0
        %620 = vmatpush.bf16.xpose.msra.mxu0 0
        %621 = vmatpush.bf16.xpose.msra.mxu0 %v612
        %622 = vmatmul.bf16.gmra.mxu0 %v609
        %v623 = vpop.f32.mrf.mxu0
        %v624 = vadd.f32 %v532, %v623
        %v625 = vpop.f32.mrf.mxu0
        %626 = vdwg.mxu0
        %v628 = vunpack.c.l.b16 %v597
        %v629 = vpack.c.b16 %v628, %v628
        %630 = vrot.lane.b32.xlu0 %v629, 96
        %v631 = vpop.permute.xlu0 %630
        %v633 = vsel %vm607, %v597, 0
        %v636 = vsel %vm607, %v631, 0
        %638 = vmatpush.bf16.xpose.msra.mxu0 0
        %639 = vmatpush.bf16.xpose.msra.mxu0 0
        %640 = vmatpush.bf16.xpose.msra.mxu0 0
        %641 = vmatpush.bf16.xpose.msra.mxu0 0
        %642 = vmatpush.bf16.xpose.msra.mxu0 0
        %643 = vmatpush.bf16.xpose.msra.mxu0 0
        %644 = vmatpush.bf16.xpose.msra.mxu0 0
        %645 = vmatpush.bf16.xpose.msra.mxu0 %v636
        %646 = vmatmul.bf16.gmra.mxu0 %v633
        %v647 = vpop.f32.mrf.mxu0
        %v648 = vadd.f32 %v533, %v647
        %v649 = vpop.f32.mrf.mxu0
        %650 = vdwg.mxu0
        %v652 = vunpack.c.l.b16 %v598
        %v653 = vpack.c.b16 %v652, %v652
        %654 = vrot.lane.b32.xlu0 %v653, 96
        %v655 = vpop.permute.xlu0 %654
        %v657 = vsel %vm607, %v598, 0
        %v660 = vsel %vm607, %v655, 0
        %662 = vmatpush.bf16.xpose.msra.mxu0 0
        %663 = vmatpush.bf16.xpose.msra.mxu0 0
        %664 = vmatpush.bf16.xpose.msra.mxu0 0
        %665 = vmatpush.bf16.xpose.msra.mxu0 0
        %666 = vmatpush.bf16.xpose.msra.mxu0 0
        %667 = vmatpush.bf16.xpose.msra.mxu0 0
        %668 = vmatpush.bf16.xpose.msra.mxu0 0
        %669 = vmatpush.bf16.xpose.msra.mxu0 %v660
        %670 = vmatmul.bf16.gmra.mxu0 %v657
        %v671 = vpop.f32.mrf.mxu0
        %v672 = vadd.f32 %v534, %v671
        %v673 = vpop.f32.mrf.mxu0
        %674 = vdwg.mxu0
        %v676 = vunpack.c.l.b16 %v599
        %v677 = vpack.c.b16 %v676, %v676
        %678 = vrot.lane.b32.xlu0 %v677, 96
        %v679 = vpop.permute.xlu0 %678
        %v681 = vsel %vm607, %v599, 0
        %v684 = vsel %vm607, %v679, 0
        %686 = vmatpush.bf16.xpose.msra.mxu0 0
        %687 = vmatpush.bf16.xpose.msra.mxu0 0
        %688 = vmatpush.bf16.xpose.msra.mxu0 0
        %689 = vmatpush.bf16.xpose.msra.mxu0 0
        %690 = vmatpush.bf16.xpose.msra.mxu0 0
        %691 = vmatpush.bf16.xpose.msra.mxu0 0
        %692 = vmatpush.bf16.xpose.msra.mxu0 0
        %693 = vmatpush.bf16.xpose.msra.mxu0 %v684
        %694 = vmatmul.bf16.gmra.mxu0 %v681
        %v695 = vpop.f32.mrf.mxu0
        %v696 = vadd.f32 %v532, %v695
        %v697 = vpop.f32.mrf.mxu0
        %698 = vdwg.mxu0
        %v700 = vunpack.c.l.b16 %v600
        %v701 = vpack.c.b16 %v700, %v700
        %702 = vrot.lane.b32.xlu0 %v701, 96
        %v703 = vpop.permute.xlu0 %702
        %v705 = vsel %vm607, %v600, 0
        %v708 = vsel %vm607, %v703, 0
        %710 = vmatpush.bf16.xpose.msra.mxu0 0
        %711 = vmatpush.bf16.xpose.msra.mxu0 0
        %712 = vmatpush.bf16.xpose.msra.mxu0 0
        %713 = vmatpush.bf16.xpose.msra.mxu0 0
        %714 = vmatpush.bf16.xpose.msra.mxu0 0
        %715 = vmatpush.bf16.xpose.msra.mxu0 0
        %716 = vmatpush.bf16.xpose.msra.mxu0 0
        %717 = vmatpush.bf16.xpose.msra.mxu0 %v708
        %718 = vmatmul.bf16.gmra.mxu0 %v705
        %v719 = vpop.f32.mrf.mxu0
        %v720 = vadd.f32 %v533, %v719
        %v721 = vpop.f32.mrf.mxu0
        %722 = vdwg.mxu0
        %v724 = vunpack.c.l.b16 %v601
        %v725 = vpack.c.b16 %v724, %v724
        %726 = vrot.lane.b32.xlu0 %v725, 96
        %v727 = vpop.permute.xlu0 %726
        %v729 = vsel %vm607, %v601, 0
        %v732 = vsel %vm607, %v727, 0
        %734 = vmatpush.bf16.xpose.msra.mxu0 0
        %735 = vmatpush.bf16.xpose.msra.mxu0 0
        %736 = vmatpush.bf16.xpose.msra.mxu0 0
        %737 = vmatpush.bf16.xpose.msra.mxu0 0
        %738 = vmatpush.bf16.xpose.msra.mxu0 0
        %739 = vmatpush.bf16.xpose.msra.mxu0 0
        %740 = vmatpush.bf16.xpose.msra.mxu0 0
        %741 = vmatpush.bf16.xpose.msra.mxu0 %v732
        %742 = vmatmul.bf16.gmra.mxu0 %v729
        %v743 = vpop.f32.mrf.mxu0
        %v744 = vadd.f32 %v534, %v743
        %v745 = vpop.f32.mrf.mxu0
        %746 = vdwg.mxu0
        %vm747 = vcmask 64512
        %v748 = vsel %vm747, %v624, -inf
        %749 = vmax.xlane.f32.xlu0 %v748
        %v750 = vpop.xlane.xlu0 %749
        %v751 = vsel %vm747, %v648, -inf
        %752 = vmax.xlane.f32.xlu0 %v751
        %v753 = vpop.xlane.xlu0 %752
        %v754 = vsel %vm747, %v672, -inf
        %755 = vmax.xlane.f32.xlu0 %v754
        %v756 = vpop.xlane.xlu0 %755
        %v757 = vsel %vm747, %v696, -inf
        %758 = vmax.xlane.f32.xlu0 %v757
        %v759 = vpop.xlane.xlu0 %758
        %v760 = vsel %vm747, %v720, -inf
        %761 = vmax.xlane.f32.xlu0 %v760
        %v762 = vpop.xlane.xlu0 %761
        %v763 = vsel %vm747, %v744, -inf
        %764 = vmax.xlane.f32.xlu0 %v763
        %v765 = vpop.xlane.xlu0 %764
        %v766 = vsub.f32 %v624, %v750
        %v767 = vsub.f32 %v648, %v753
        %v768 = vsub.f32 %v672, %v756
        %v769 = vsub.f32 %v696, %v759
        %v770 = vsub.f32 %v720, %v762
        %v771 = vsub.f32 %v744, %v765
        %v772 = vmul.f32 %v766, 1.442695
        %v773 = vpow.pop %v772
        %v774 = vmul.f32 %v767, 1.442695
        %v775 = vpow.pop %v774
        %v776 = vmul.f32 %v768, 1.442695
        %v777 = vpow.pop %v776
        %v778 = vmul.f32 %v769, 1.442695
        %v779 = vpow.pop %v778
        %v780 = vmul.f32 %v770, 1.442695
        %v781 = vpow.pop %v780
        %v782 = vmul.f32 %v771, 1.442695
        %v783 = vpow.pop %v782
        %v784 = vsel %vm747, %v773, 0.0
        %785 = vadd.xlane.f32.xlu0 %v784
        %v786 = vpop.xlane.xlu0 %785
        %v787 = vsel %vm747, %v775, 0.0
        %788 = vadd.xlane.f32.xlu0 %v787
        %v789 = vpop.xlane.xlu0 %788
        %v790 = vsel %vm747, %v777, 0.0
        %791 = vadd.xlane.f32.xlu0 %v790
        %v792 = vpop.xlane.xlu0 %791
        %v793 = vsel %vm747, %v779, 0.0
        %794 = vadd.xlane.f32.xlu0 %v793
        %v795 = vpop.xlane.xlu0 %794
        %v796 = vsel %vm747, %v781, 0.0
        %797 = vadd.xlane.f32.xlu0 %v796
        %v798 = vpop.xlane.xlu0 %797
        %v799 = vsel %vm747, %v783, 0.0
        %800 = vadd.xlane.f32.xlu0 %v799
        %v801 = vpop.xlane.xlu0 %800
        %v802 = vrcp.pop %v786
        %v803 = vrcp.pop %v789
        %v804 = vrcp.pop %v792
        %v805 = vrcp.pop %v795
        %v806 = vrcp.pop %v798
        %v807 = vrcp.pop %v801
        %v808 = vmul.f32 %v773, %v802
        %v809 = vmul.f32 %v775, %v803
        %v810 = vmul.f32 %v777, %v804
        %v811 = vmul.f32 %v779, %v805
        %v812 = vmul.f32 %v781, %v806
        %v813 = vmul.f32 %v783, %v807
        %v814 = vpack.c.bf16 %v808, %v808
        %v815 = vpack.c.bf16 %v809, %v809
        %v816 = vpack.c.bf16 %v810, %v810
        %v817 = vpack.c.bf16 %v811, %v811
        %v818 = vpack.c.bf16 %v812, %v812
        %v819 = vpack.c.bf16 %v813, %v813
        %820 = vrot.lane.b32.xlu0 %v604, 64
        %v821 = vpop.permute.xlu0 %820
        %v823 = vsel %vm747, %v814, 0
        %vm825 = vcmask 1043456
        %v827 = vsel %vm825, %v821, 0
        %829 = vmatpush.bf16.msra.mxu0 0
        %830 = vmatpush.bf16.msra.mxu0 0
        %831 = vmatpush.bf16.msra.mxu0 0
        %832 = vmatpush.bf16.msra.mxu0 0
        %833 = vmatpush.bf16.msra.mxu0 0
        %834 = vmatpush.bf16.msra.mxu0 0
        %835 = vmatpush.bf16.msra.mxu0 0
        %836 = vmatpush.bf16.msra.mxu0 %v827
        %837 = vmatmul.bf16.gmra.mxu0 %v823
        %v838 = vpop.f32.mrf.mxu0
        %v839 = vadd.f32 0.0, %v838
        %v840 = vpop.f32.mrf.mxu0
        %841 = vdwg.mxu0
        %842 = vrot.lane.b32.xlu0 %v629, 64
        %v843 = vpop.permute.xlu0 %842
        %v845 = vsel %vm747, %v815, 0
        %v848 = vsel %vm825, %v843, 0
        %850 = vmatpush.bf16.msra.mxu0 0
        %851 = vmatpush.bf16.msra.mxu0 0
        %852 = vmatpush.bf16.msra.mxu0 0
        %853 = vmatpush.bf16.msra.mxu0 0
        %854 = vmatpush.bf16.msra.mxu0 0
        %855 = vmatpush.bf16.msra.mxu0 0
        %856 = vmatpush.bf16.msra.mxu0 0
        %857 = vmatpush.bf16.msra.mxu0 %v848
        %858 = vmatmul.bf16.gmra.mxu0 %v845
        %v859 = vpop.f32.mrf.mxu0
        %v860 = vadd.f32 0.0, %v859
        %v861 = vpop.f32.mrf.mxu0
        %862 = vdwg.mxu0
        %863 = vrot.lane.b32.xlu0 %v653, 64
        %v864 = vpop.permute.xlu0 %863
        %v866 = vsel %vm747, %v816, 0
        %v869 = vsel %vm825, %v864, 0
        %871 = vmatpush.bf16.msra.mxu0 0
        %872 = vmatpush.bf16.msra.mxu0 0
        %873 = vmatpush.bf16.msra.mxu0 0
        %874 = vmatpush.bf16.msra.mxu0 0
        %875 = vmatpush.bf16.msra.mxu0 0
        %876 = vmatpush.bf16.msra.mxu0 0
        %877 = vmatpush.bf16.msra.mxu0 0
        %878 = vmatpush.bf16.msra.mxu0 %v869
        %879 = vmatmul.bf16.gmra.mxu0 %v866
        %v880 = vpop.f32.mrf.mxu0
        %v881 = vadd.f32 0.0, %v880
        %v882 = vpop.f32.mrf.mxu0
        %883 = vdwg.mxu0
        %884 = vrot.lane.b32.xlu0 %v677, 64
        %v885 = vpop.permute.xlu0 %884
        %v887 = vsel %vm747, %v817, 0
        %v890 = vsel %vm825, %v885, 0
        %892 = vmatpush.bf16.msra.mxu0 0
        %893 = vmatpush.bf16.msra.mxu0 0
        %894 = vmatpush.bf16.msra.mxu0 0
        %895 = vmatpush.bf16.msra.mxu0 0
        %896 = vmatpush.bf16.msra.mxu0 0
        %897 = vmatpush.bf16.msra.mxu0 0
        %898 = vmatpush.bf16.msra.mxu0 0
        %899 = vmatpush.bf16.msra.mxu0 %v890
        %900 = vmatmul.bf16.gmra.mxu0 %v887
        %v901 = vpop.f32.mrf.mxu0
        %v902 = vadd.f32 0.0, %v901
        %v903 = vpop.f32.mrf.mxu0
        %904 = vdwg.mxu0
        %905 = vrot.lane.b32.xlu0 %v701, 64
        %v906 = vpop.permute.xlu0 %905
        %v908 = vsel %vm747, %v818, 0
        %v911 = vsel %vm825, %v906, 0
        %913 = vmatpush.bf16.msra.mxu0 0
        %914 = vmatpush.bf16.msra.mxu0 0
        %915 = vmatpush.bf16.msra.mxu0 0
        %916 = vmatpush.bf16.msra.mxu0 0
        %917 = vmatpush.bf16.msra.mxu0 0
        %918 = vmatpush.bf16.msra.mxu0 0
        %919 = vmatpush.bf16.msra.mxu0 0
        %920 = vmatpush.bf16.msra.mxu0 %v911
        %921 = vmatmul.bf16.gmra.mxu0 %v908
        %v922 = vpop.f32.mrf.mxu0
        %v923 = vadd.f32 0.0, %v922
        %v924 = vpop.f32.mrf.mxu0
        %925 = vdwg.mxu0
        %926 = vrot.lane.b32.xlu0 %v725, 64
        %v927 = vpop.permute.xlu0 %926
        %v929 = vsel %vm747, %v819, 0
        %v932 = vsel %vm825, %v927, 0
        %934 = vmatpush.bf16.msra.mxu0 0
        %935 = vmatpush.bf16.msra.mxu0 0
        %936 = vmatpush.bf16.msra.mxu0 0
        %937 = vmatpush.bf16.msra.mxu0 0
        %938 = vmatpush.bf16.msra.mxu0 0
        %939 = vmatpush.bf16.msra.mxu0 0
        %940 = vmatpush.bf16.msra.mxu0 0
        %941 = vmatpush.bf16.msra.mxu0 %v932
        %942 = vmatmul.bf16.gmra.mxu0 %v929
        %v943 = vpop.f32.mrf.mxu0
        %v944 = vadd.f32 0.0, %v943
        %v945 = vpop.f32.mrf.mxu0
        %946 = vdwg.mxu0
        %950 = vrot.lane.b32.xlu0 %v902, 16
        %v951 = vpop.permute.xlu0 %950
        %952 = vrot.lane.b32.xlu0 %v923, 16
        %v953 = vpop.permute.xlu0 %952
        %954 = vrot.lane.b32.xlu0 %v944, 16
        %v955 = vpop.permute.xlu0 %954
        %v959 = vsel %vm607, %v839, %v951
        %v960 = vsel %vm607, %v860, %v953
        %v961 = vsel %vm607, %v881, %v955
        %v962 = vpack.c.bf16 %v960, %v959
        %v963 = vpack.c.bf16 %v961, %v961
        %v964 = vld [vmem:[%s5] sm:$0xf]
        %v965 = vld [vmem:[%s5 + $0x4] sm:$0xf]
        %v966 = vld [vmem:[%s5 + $0x8] sm:$0xf]
        %v967 = vld [vmem:[%s5 + $0xc] sm:$0xf]
        %v968 = vld [vmem:[%s6] sm:$0x1]
        %v970 = vperm.slane %v968, 0
        %v976 = vunpack.c.l.b16 %v964
        %v977 = vunpack.c.l.b16 %v965
        %v978 = vunpack.c.l.b16 %v966
        %v979 = vunpack.c.l.b16 %v967
        %v980 = vpack.c.b16 %v977, %v976
        %v981 = vpack.c.b16 %v979, %v978
        %v985 = vsel %vm522, %v962, 0
        %v988 = vsel %vm522, %v963, 0
        %990 = vmatpush.bf16.msra.mxu0 0
        %991 = vmatpush.bf16.msra.mxu0 0
        %992 = vmatpush.bf16.msra.mxu0 0
        %993 = vmatpush.bf16.msra.mxu0 0
        %994 = vmatpush.bf16.msra.mxu0 0
        %995 = vmatpush.bf16.msra.mxu0 0
        %996 = vmatpush.bf16.msra.mxu0 %v981
        %997 = vmatpush.bf16.msra.mxu0 %v980
        %998 = vmatmul.bf16.gmra.mxu0 %v985
        %v999 = vpop.f32.mrf.mxu0
        %v1000 = vadd.f32 %v970, %v999
        %v1001 = vpop.f32.mrf.mxu0
        %v1002 = vadd.f32 %v970, %v1001
        %1003 = vmatmul.bf16.gmra.mxu0 %v988
        %v1004 = vpop.f32.mrf.mxu0
        %v1005 = vadd.f32 %v970, %v1004
        %v1006 = vpop.f32.mrf.mxu0
        %1007 = vdwg.mxu0
        %v1008 = vadd.f32 %v519, %v1000
        %v1009 = vadd.f32 %v520, %v1002
        %v1010 = vadd.f32 %v521, %v1005
        %v1011 = vld [vmem:[%s7] sm:$0x1]
        %v1012 = vld [vmem:[%s8] sm:$0x1]
        %v1013 = vsel %vm522, %v1008, 0.0
        %1014 = vadd.xlane.f32.xlu0 %v1013
        %v1015 = vpop.xlane.xlu0 %1014
        %v1016 = vsel %vm522, %v1009, 0.0
        %1017 = vadd.xlane.f32.xlu0 %v1016
        %v1018 = vpop.xlane.xlu0 %1017
        %v1019 = vsel %vm522, %v1010, 0.0
        %1020 = vadd.xlane.f32.xlu0 %v1019
        %v1021 = vpop.xlane.xlu0 %1020
        %v1022 = vrcp.pop 32.0
        %v1023 = vmul.f32 32.0, %v1022
        %v1024 = vsub.f32 1.0, %v1023
        %v1025 = vmul.f32 %v1022, %v1024
        %v1026 = vadd.f32 %v1022, %v1025
        %vm1027 = vweird.f32 %v1022
        %v1028 = vsel %vm1027, %v1022, %v1026
        %v1029 = vmul.f32 %v1015, %v1028
        %v1030 = vmul.f32 %v1018, %v1028
        %v1031 = vmul.f32 %v1021, %v1028
        %v1032 = vsub.f32 %v1008, %v1029
        %v1033 = vsub.f32 %v1009, %v1030
        %v1034 = vsub.f32 %v1010, %v1031
        %v1035 = vmul.f32 %v1032, %v1032
        %v1036 = vmul.f32 %v1033, %v1033
        %v1037 = vmul.f32 %v1034, %v1034
        %v1038 = vsel %vm522, %v1035, 0.0
        %1039 = vadd.xlane.f32.xlu0 %v1038
        %v1040 = vpop.xlane.xlu0 %1039
        %v1041 = vsel %vm522, %v1036, 0.0
        %1042 = vadd.xlane.f32.xlu0 %v1041
        %v1043 = vpop.xlane.xlu0 %1042
        %v1044 = vsel %vm522, %v1037, 0.0
        %1045 = vadd.xlane.f32.xlu0 %v1044
        %v1046 = vpop.xlane.xlu0 %1045
        %v1047 = vmul.f32 %v1040, %v1028
        %v1048 = vmul.f32 %v1043, %v1028
        %v1049 = vmul.f32 %v1046, %v1028
        %v1050 = vadd.f32 %v1047, 1e-05
        %v1051 = vadd.f32 %v1048, 1e-05
        %v1052 = vadd.f32 %v1049, 1e-05
        %v1053 = vrsqrt.pop %v1050
        %v1054 = vmul.f32 %v1053, %v1050
        %v1055 = vmul.f32 %v1054, %v1053
        %v1056 = vmul.f32 0.5, %v1055
        %v1057 = vsub.f32 1.5, %v1056
        %v1058 = vmul.f32 %v1053, %v1057
        %vm1059 = vweird.f32 %v1050
        %vm1060 = vweird.f32 %v1053
        %vm1061 = vmor %vm1059, %vm1060
        %v1062 = vsel %vm1061, %v1053, %v1058
        %v1063 = vrsqrt.pop %v1051
        %v1064 = vmul.f32 %v1063, %v1051
        %v1065 = vmul.f32 %v1064, %v1063
        %v1066 = vmul.f32 0.5, %v1065
        %v1067 = vsub.f32 1.5, %v1066
        %v1068 = vmul.f32 %v1063, %v1067
        %vm1069 = vweird.f32 %v1051
        %vm1070 = vweird.f32 %v1063
        %vm1071 = vmor %vm1069, %vm1070
        %v1072 = vsel %vm1071, %v1063, %v1068
        %v1073 = vrsqrt.pop %v1052
        %v1074 = vmul.f32 %v1073, %v1052
        %v1075 = vmul.f32 %v1074, %v1073
        %v1076 = vmul.f32 0.5, %v1075
        %v1077 = vsub.f32 1.5, %v1076
        %v1078 = vmul.f32 %v1073, %v1077
        %vm1079 = vweird.f32 %v1052
        %vm1080 = vweird.f32 %v1073
        %vm1081 = vmor %vm1079, %vm1080
        %v1082 = vsel %vm1081, %v1073, %v1078
        %v1083 = vmul.f32 %v1032, %v1062
        %v1084 = vmul.f32 %v1033, %v1072
        %v1085 = vmul.f32 %v1034, %v1082
        %v1087 = vperm.slane %v1011, 0
        %v1089 = vmul.f32 %v1083, %v1087
        %v1090 = vmul.f32 %v1084, %v1087
        %v1091 = vmul.f32 %v1085, %v1087
        %v1093 = vperm.slane %v1012, 0
        %v1095 = vadd.f32 %v1089, %v1093
        %v1096 = vadd.f32 %v1090, %v1093
        %v1097 = vadd.f32 %v1091, %v1093
        %v1098 = vpack.c.bf16 %v1096, %v1095
        %v1099 = vpack.c.bf16 %v1097, %v1097
        %v1100 = vld [vmem:[%s9] sm:$0xf]
        %v1101 = vld [vmem:[%s9 + $0x4] sm:$0xf]
        %v1102 = vld [vmem:[%s9 + $0x8] sm:$0xf]
        %v1103 = vld [vmem:[%s9 + $0xc] sm:$0xf]
        %v1104 = vld [vmem:[%s10] sm:$0x1]
        %v1106 = vperm.slane %v1104, 0
        %v1112 = vunpack.c.l.b16 %v1100
        %v1113 = vunpack.c.l.b16 %v1101
        %v1114 = vunpack.c.l.b16 %v1102
        %v1115 = vunpack.c.l.b16 %v1103
        %v1116 = vpack.c.b16 %v1113, %v1112
        %v1117 = vpack.c.b16 %v1115, %v1114
        %v1121 = vsel %vm522, %v1098, 0
        %v1124 = vsel %vm522, %v1099, 0
        %1126 = vmatpush.bf16.msra.mxu0 0
        %1127 = vmatpush.bf16.msra.mxu0 0
        %1128 = vmatpush.bf16.msra.mxu0 0
        %1129 = vmatpush.bf16.msra.mxu0 0
        %1130 = vmatpush.bf16.msra.mxu0 0
        %1131 = vmatpush.bf16.msra.mxu0 0
        %1132 = vmatpush.bf16.msra.mxu0 %v1117
        %1133 = vmatpush.bf16.msra.mxu0 %v1116
        %1134 = vmatmul.bf16.gmra.mxu0 %v1121
        %v1135 = vpop.f32.mrf.mxu0
        %v1136 = vadd.f32 %v1106, %v1135
        %v1137 = vpop.f32.mrf.mxu0
        %v1138 = vadd.f32 %v1106, %v1137
        %1139 = vmatmul.bf16.gmra.mxu0 %v1124
        %v1140 = vpop.f32.mrf.mxu0
        %v1141 = vadd.f32 %v1106, %v1140
        %v1142 = vpop.f32.mrf.mxu0
        %1143 = vdwg.mxu0
        %v1144 = vmul.f32 %v1136, %v1136
        %v1145 = vmul.f32 %v1138, %v1138
        %v1146 = vmul.f32 %v1141, %v1141
        %v1147 = vmul.f32 %v1136, %v1144
        %v1148 = vmul.f32 %v1138, %v1145
        %v1149 = vmul.f32 %v1141, %v1146
        %v1150 = vmul.f32 %v1147, 0.044715
        %v1151 = vmul.f32 %v1148, 0.044715
        %v1152 = vmul.f32 %v1149, 0.044715
        %v1153 = vadd.f32 %v1136, %v1150
        %v1154 = vadd.f32 %v1138, %v1151
        %v1155 = vadd.f32 %v1141, %v1152
        %v1156 = vmul.f32 %v1153, 0.7978846
        %v1157 = vmul.f32 %v1154, 0.7978846
        %v1158 = vmul.f32 %v1155, 0.7978846
        %v1159 = vtanh.pop %v1156
        %v1160 = vtanh.pop %v1157
        %v1161 = vtanh.pop %v1158
        %v1162 = vadd.f32 %v1159, 1.0
        %v1163 = vadd.f32 %v1160, 1.0
        %v1164 = vadd.f32 %v1161, 1.0
        %v1165 = vmul.f32 %v1162, 0.5
        %v1166 = vmul.f32 %v1163, 0.5
        %v1167 = vmul.f32 %v1164, 0.5
        %v1168 = vmul.f32 %v1136, %v1165
        %v1169 = vmul.f32 %v1138, %v1166
        %v1170 = vmul.f32 %v1141, %v1167
        %v1171 = vpack.c.bf16 %v1169, %v1168
        %v1172 = vpack.c.bf16 %v1170, %v1170
        %v1173 = vld [vmem:[%s11] sm:$0xf]
        %v1174 = vld [vmem:[%s11 + $0x4] sm:$0xf]
        %v1175 = vld [vmem:[%s11 + $0x8] sm:$0xf]
        %v1176 = vld [vmem:[%s11 + $0xc] sm:$0xf]
        %v1177 = vld [vmem:[%s11 + $0x10] sm:$0xf]
        %v1178 = vld [vmem:[%s11 + $0x14] sm:$0xf]
        %v1179 = vld [vmem:[%s11 + $0x18] sm:$0xf]
        %v1180 = vld [vmem:[%s11 + $0x1c] sm:$0xf]
        %v1181 = vld [vmem:[%s12] sm:$0x1]
        %v1183 = vperm.slane %v1181, 0
        %v1193 = vunpack.c.l.b16 %v1173
        %v1194 = vunpack.c.l.b16 %v1174
        %v1195 = vunpack.c.l.b16 %v1175
        %v1196 = vunpack.c.l.b16 %v1176
        %v1197 = vunpack.c.l.b16 %v1177
        %v1198 = vunpack.c.l.b16 %v1178
        %v1199 = vunpack.c.l.b16 %v1179
        %v1200 = vunpack.c.l.b16 %v1180
        %v1201 = vpack.c.b16 %v1194, %v1193
        %v1202 = vpack.c.b16 %v1196, %v1195
        %v1203 = vpack.c.b16 %v1198, %v1197
        %v1204 = vpack.c.b16 %v1200, %v1199
        %vm1209 = vcmask 523264
        %v1211 = vsel %vm1209, %v1171, 0
        %v1214 = vsel %vm1209, %v1172, 0
        %1216 = vmatpush.bf16.msra.mxu0 0
        %1217 = vmatpush.bf16.msra.mxu0 0
        %1218 = vmatpush.bf16.msra.mxu0 0
        %1219 = vmatpush.bf16.msra.mxu0 0
        %1220 = vmatpush.bf16.msra.mxu0 %v1204
        %1221 = vmatpush.bf16.msra.mxu0 %v1203
        %1222 = vmatpush.bf16.msra.mxu0 %v1202
        %1223 = vmatpush.bf16.msra.mxu0 %v1201
        %1224 = vmatmul.bf16.gmra.mxu0 %v1211
        %v1225 = vpop.f32.mrf.mxu0
        %v1226 = vadd.f32 %v1183, %v1225
        %v1227 = vpop.f32.mrf.mxu0
        %v1228 = vadd.f32 %v1183, %v1227
        %1229 = vmatmul.bf16.gmra.mxu0 %v1214
        %v1230 = vpop.f32.mrf.mxu0
        %v1231 = vadd.f32 %v1183, %v1230
        %v1232 = vpop.f32.mrf.mxu0
        %1233 = vdwg.mxu0
        %v1234 = vadd.f32 %v1095, %v1226
        %v1235 = vadd.f32 %v1096, %v1228
        %v1236 = vadd.f32 %v1097, %v1231
        %v1237 = vld [vmem:[%s13] sm:$0x1]
        %v1238 = vld [vmem:[%s14] sm:$0x1]
        %v1239 = vsel %vm522, %v1234, 0.0
        %1240 = vadd.xlane.f32.xlu0 %v1239
        %v1241 = vpop.xlane.xlu0 %1240
        %v1242 = vsel %vm522, %v1235, 0.0
        %1243 = vadd.xlane.f32.xlu0 %v1242
        %v1244 = vpop.xlane.xlu0 %1243
        %v1245 = vsel %vm522, %v1236, 0.0
        %1246 = vadd.xlane.f32.xlu0 %v1245
        %v1247 = vpop.xlane.xlu0 %1246
        %v1248 = vmul.f32 %v1241, %v1028
        %v1249 = vmul.f32 %v1244, %v1028
        %v1250 = vmul.f32 %v1247, %v1028
        %v1251 = vsub.f32 %v1234, %v1248
        %v1252 = vsub.f32 %v1235, %v1249
        %v1253 = vsub.f32 %v1236, %v1250
        %v1254 = vmul.f32 %v1251, %v1251
        %v1255 = vmul.f32 %v1252, %v1252
        %v1256 = vmul.f32 %v1253, %v1253
        %v1257 = vsel %vm522, %v1254, 0.0
        %1258 = vadd.xlane.f32.xlu0 %v1257
        %v1259 = vpop.xlane.xlu0 %1258
        %v1260 = vsel %vm522, %v1255, 0.0
        %1261 = vadd.xlane.f32.xlu0 %v1260
        %v1262 = vpop.xlane.xlu0 %1261
        %v1263 = vsel %vm522, %v1256, 0.0
        %1264 = vadd.xlane.f32.xlu0 %v1263
        %v1265 = vpop.xlane.xlu0 %1264
        %v1266 = vmul.f32 %v1259, %v1028
        %v1267 = vmul.f32 %v1262, %v1028
        %v1268 = vmul.f32 %v1265, %v1028
        %v1269 = vadd.f32 %v1266, 1e-05
        %v1270 = vadd.f32 %v1267, 1e-05
        %v1271 = vadd.f32 %v1268, 1e-05
        %v1272 = vrsqrt.pop %v1269
        %v1273 = vmul.f32 %v1272, %v1269
        %v1274 = vmul.f32 %v1273, %v1272
        %v1275 = vmul.f32 0.5, %v1274
        %v1276 = vsub.f32 1.5, %v1275
        %v1277 = vmul.f32 %v1272, %v1276
        %vm1278 = vweird.f32 %v1269
        %vm1279 = vweird.f32 %v1272
        %vm1280 = vmor %vm1278, %vm1279
        %v1281 = vsel %vm1280, %v1272, %v1277
        %v1282 = vrsqrt.pop %v1270
        %v1283 = vmul.f32 %v1282, %v1270
        %v1284 = vmul.f32 %v1283, %v1282
        %v1285 = vmul.f32 0.5, %v1284
        %v1286 = vsub.f32 1.5, %v1285
        %v1287 = vmul.f32 %v1282, %v1286
        %vm1288 = vweird.f32 %v1270
        %vm1289 = vweird.f32 %v1282
        %vm1290 = vmor %vm1288, %vm1289
        %v1291 = vsel %vm1290, %v1282, %v1287
        %v1292 = vrsqrt.pop %v1271
        %v1293 = vmul.f32 %v1292, %v1271
        %v1294 = vmul.f32 %v1293, %v1292
        %v1295 = vmul.f32 0.5, %v1294
        %v1296 = vsub.f32 1.5, %v1295
        %v1297 = vmul.f32 %v1292, %v1296
        %vm1298 = vweird.f32 %v1271
        %vm1299 = vweird.f32 %v1292
        %vm1300 = vmor %vm1298, %vm1299
        %v1301 = vsel %vm1300, %v1292, %v1297
        %v1302 = vmul.f32 %v1251, %v1281
        %v1303 = vmul.f32 %v1252, %v1291
        %v1304 = vmul.f32 %v1253, %v1301
        %v1306 = vperm.slane %v1237, 0
        %v1308 = vmul.f32 %v1302, %v1306
        %v1309 = vmul.f32 %v1303, %v1306
        %v1310 = vmul.f32 %v1304, %v1306
        %v1312 = vperm.slane %v1238, 0
        %v1314 = vadd.f32 %v1308, %v1312
        %v1315 = vadd.f32 %v1309, %v1312
        %v1316 = vadd.f32 %v1310, %v1312
        %s1317 = scalar_lea.vmem %s502, 24 [#allocation2]
        %1318 = vst.msk [vmem:[%s1317] sm:$0xff] %vm522, %v1314
        %1319 = vst.msk [vmem:[%s1317 + $0x8] sm:$0xff] %vm522, %v1315
        %1320 = vst.msk [vmem:[%s1317 + $0x10] sm:$0xff] %vm522, %v1316
        %v1321 = vpack.c.bf16 %v1315, %v1314
        %v1322 = vpack.c.bf16 %v1316, %v1316
        %s1323 = scalar_lea.vmem %s3, 16
        %v1324 = vld [vmem:[%s1323] sm:$0xf]
        %v1325 = vld [vmem:[%s1323 + $0x4] sm:$0xf]
        %v1326 = vld [vmem:[%s1323 + $0x8] sm:$0xf]
        %v1327 = vld [vmem:[%s1323 + $0xc] sm:$0xf]
        %s1328 = scalar_lea.vmem %s4, 1
        %v1329 = vld [vmem:[%s1328] sm:$0x1]
        %v1331 = vperm.slane %v1329, 0
        %v1337 = vunpack.c.l.b16 %v1324
        %v1338 = vunpack.c.l.b16 %v1325
        %v1339 = vunpack.c.l.b16 %v1326
        %v1340 = vunpack.c.l.b16 %v1327
        %v1341 = vpack.c.b16 %v1338, %v1337
        %v1342 = vpack.c.b16 %v1340, %v1339
        %v1346 = vsel %vm522, %v1321, 0
        %v1349 = vsel %vm522, %v1322, 0
        %1351 = vmatpush.bf16.msra.mxu0 0
        %1352 = vmatpush.bf16.msra.mxu0 0
        %1353 = vmatpush.bf16.msra.mxu0 0
        %1354 = vmatpush.bf16.msra.mxu0 0
        %1355 = vmatpush.bf16.msra.mxu0 0
        %1356 = vmatpush.bf16.msra.mxu0 0
        %1357 = vmatpush.bf16.msra.mxu0 %v1342
        %1358 = vmatpush.bf16.msra.mxu0 %v1341
        %1359 = vmatmul.bf16.gmra.mxu0 %v1346
        %v1360 = vpop.f32.mrf.mxu0
        %v1361 = vadd.f32 %v1331, %v1360
        %v1362 = vpop.f32.mrf.mxu0
        %v1363 = vadd.f32 %v1331, %v1362
        %1364 = vmatmul.bf16.gmra.mxu0 %v1349
        %v1365 = vpop.f32.mrf.mxu0
        %v1366 = vadd.f32 %v1331, %v1365
        %v1367 = vpop.f32.mrf.mxu0
        %1368 = vdwg.mxu0
        %1372 = vrot.lane.b32.xlu0 %v1361, 112
        %v1373 = vpop.permute.xlu0 %1372
        %1374 = vrot.lane.b32.xlu0 %v1363, 112
        %v1375 = vpop.permute.xlu0 %1374
        %1376 = vrot.lane.b32.xlu0 %v1366, 112
        %v1377 = vpop.permute.xlu0 %1376
        %v1381 = vpack.c.bf16 %v1361, %v1361
        %v1382 = vpack.c.bf16 %v1363, %v1363
        %v1383 = vpack.c.bf16 %v1366, %v1366
        %v1384 = vpack.c.bf16 %v1373, %v1373
        %v1385 = vpack.c.bf16 %v1375, %v1375
        %v1386 = vpack.c.bf16 %v1377, %v1377
        %v1388 = vunpack.c.l.b16 %v1381
        %v1389 = vpack.c.b16 %v1388, %v1388
        %1390 = vrot.lane.b32.xlu0 %v1389, 96
        %v1391 = vpop.permute.xlu0 %1390
        %v1393 = vsel %vm607, %v1381, 0
        %v1396 = vsel %vm607, %v1391, 0
        %1398 = vmatpush.bf16.xpose.msra.mxu0 0
        %1399 = vmatpush.bf16.xpose.msra.mxu0 0
        %1400 = vmatpush.bf16.xpose.msra.mxu0 0
        %1401 = vmatpush.bf16.xpose.msra.mxu0 0
        %1402 = vmatpush.bf16.xpose.msra.mxu0 0
        %1403 = vmatpush.bf16.xpose.msra.mxu0 0
        %1404 = vmatpush.bf16.xpose.msra.mxu0 0
        %1405 = vmatpush.bf16.xpose.msra.mxu0 %v1396
        %1406 = vmatmul.bf16.gmra.mxu0 %v1393
        %v1407 = vpop.f32.mrf.mxu0
        %v1408 = vadd.f32 %v532, %v1407
        %v1409 = vpop.f32.mrf.mxu0
        %1410 = vdwg.mxu0
        %v1412 = vunpack.c.l.b16 %v1382
        %v1413 = vpack.c.b16 %v1412, %v1412
        %1414 = vrot.lane.b32.xlu0 %v1413, 96
        %v1415 = vpop.permute.xlu0 %1414
        %v1417 = vsel %vm607, %v1382, 0
        %v1420 = vsel %vm607, %v1415, 0
        %1422 = vmatpush.bf16.xpose.msra.mxu0 0
        %1423 = vmatpush.bf16.xpose.msra.mxu0 0
        %1424 = vmatpush.bf16.xpose.msra.mxu0 0
        %1425 = vmatpush.bf16.xpose.msra.mxu0 0
        %1426 = vmatpush.bf16.xpose.msra.mxu0 0
        %1427 = vmatpush.bf16.xpose.msra.mxu0 0
        %1428 = vmatpush.bf16.xpose.msra.mxu0 0
        %1429 = vmatpush.bf16.xpose.msra.mxu0 %v1420
        %1430 = vmatmul.bf16.gmra.mxu0 %v1417
        %v1431 = vpop.f32.mrf.mxu0
        %v1432 = vadd.f32 %v533, %v1431
        %v1433 = vpop.f32.mrf.mxu0
        %1434 = vdwg.mxu0
        %v1436 = vunpack.c.l.b16 %v1383
        %v1437 = vpack.c.b16 %v1436, %v1436
        %1438 = vrot.lane.b32.xlu0 %v1437, 96
        %v1439 = vpop.permute.xlu0 %1438
        %v1441 = vsel %vm607, %v1383, 0
        %v1444 = vsel %vm607, %v1439, 0
        %1446 = vmatpush.bf16.xpose.msra.mxu0 0
        %1447 = vmatpush.bf16.xpose.msra.mxu0 0
        %1448 = vmatpush.bf16.xpose.msra.mxu0 0
        %1449 = vmatpush.bf16.xpose.msra.mxu0 0
        %1450 = vmatpush.bf16.xpose.msra.mxu0 0
        %1451 = vmatpush.bf16.xpose.msra.mxu0 0
        %1452 = vmatpush.bf16.xpose.msra.mxu0 0
        %1453 = vmatpush.bf16.xpose.msra.mxu0 %v1444
        %1454 = vmatmul.bf16.gmra.mxu0 %v1441
        %v1455 = vpop.f32.mrf.mxu0
        %v1456 = vadd.f32 %v534, %v1455
        %v1457 = vpop.f32.mrf.mxu0
        %1458 = vdwg.mxu0
        %v1460 = vunpack.c.l.b16 %v1384
        %v1461 = vpack.c.b16 %v1460, %v1460
        %1462 = vrot.lane.b32.xlu0 %v1461, 96
        %v1463 = vpop.permute.xlu0 %1462
        %v1465 = vsel %vm607, %v1384, 0
        %v1468 = vsel %vm607, %v1463, 0
        %1470 = vmatpush.bf16.xpose.msra.mxu0 0
        %1471 = vmatpush.bf16.xpose.msra.mxu0 0
        %1472 = vmatpush.bf16.xpose.msra.mxu0 0
        %1473 = vmatpush.bf16.xpose.msra.mxu0 0
        %1474 = vmatpush.bf16.xpose.msra.mxu0 0
        %1475 = vmatpush.bf16.xpose.msra.mxu0 0
        %1476 = vmatpush.bf16.xpose.msra.mxu0 0
        %1477 = vmatpush.bf16.xpose.msra.mxu0 %v1468
        %1478 = vmatmul.bf16.gmra.mxu0 %v1465
        %v1479 = vpop.f32.mrf.mxu0
        %v1480 = vadd.f32 %v532, %v1479
        %v1481 = vpop.f32.mrf.mxu0
        %1482 = vdwg.mxu0
        %v1484 = vunpack.c.l.b16 %v1385
        %v1485 = vpack.c.b16 %v1484, %v1484
        %1486 = vrot.lane.b32.xlu0 %v1485, 96
        %v1487 = vpop.permute.xlu0 %1486
        %v1489 = vsel %vm607, %v1385, 0
        %v1492 = vsel %vm607, %v1487, 0
        %1494 = vmatpush.bf16.xpose.msra.mxu0 0
        %1495 = vmatpush.bf16.xpose.msra.mxu0 0
        %1496 = vmatpush.bf16.xpose.msra.mxu0 0
        %1497 = vmatpush.bf16.xpose.msra.mxu0 0
        %1498 = vmatpush.bf16.xpose.msra.mxu0 0
        %1499 = vmatpush.bf16.xpose.msra.mxu0 0
        %1500 = vmatpush.bf16.xpose.msra.mxu0 0
        %1501 = vmatpush.bf16.xpose.msra.mxu0 %v1492
        %1502 = vmatmul.bf16.gmra.mxu0 %v1489
        %v1503 = vpop.f32.mrf.mxu0
        %v1504 = vadd.f32 %v533, %v1503
        %v1505 = vpop.f32.mrf.mxu0
        %1506 = vdwg.mxu0
        %v1508 = vunpack.c.l.b16 %v1386
        %v1509 = vpack.c.b16 %v1508, %v1508
        %1510 = vrot.lane.b32.xlu0 %v1509, 96
        %v1511 = vpop.permute.xlu0 %1510
        %v1513 = vsel %vm607, %v1386, 0
        %v1516 = vsel %vm607, %v1511, 0
        %1518 = vmatpush.bf16.xpose.msra.mxu0 0
        %1519 = vmatpush.bf16.xpose.msra.mxu0 0
        %1520 = vmatpush.bf16.xpose.msra.mxu0 0
        %1521 = vmatpush.bf16.xpose.msra.mxu0 0
        %1522 = vmatpush.bf16.xpose.msra.mxu0 0
        %1523 = vmatpush.bf16.xpose.msra.mxu0 0
        %1524 = vmatpush.bf16.xpose.msra.mxu0 0
        %1525 = vmatpush.bf16.xpose.msra.mxu0 %v1516
        %1526 = vmatmul.bf16.gmra.mxu0 %v1513
        %v1527 = vpop.f32.mrf.mxu0
        %v1528 = vadd.f32 %v534, %v1527
        %v1529 = vpop.f32.mrf.mxu0
        %1530 = vdwg.mxu0
        %v1531 = vsel %vm747, %v1408, -inf
        %1532 = vmax.xlane.f32.xlu0 %v1531
        %v1533 = vpop.xlane.xlu0 %1532
        %v1534 = vsel %vm747, %v1432, -inf
        %1535 = vmax.xlane.f32.xlu0 %v1534
        %v1536 = vpop.xlane.xlu0 %1535
        %v1537 = vsel %vm747, %v1456, -inf
        %1538 = vmax.xlane.f32.xlu0 %v1537
        %v1539 = vpop.xlane.xlu0 %1538
        %v1540 = vsel %vm747, %v1480, -inf
        %1541 = vmax.xlane.f32.xlu0 %v1540
        %v1542 = vpop.xlane.xlu0 %1541
        %v1543 = vsel %vm747, %v1504, -inf
        %1544 = vmax.xlane.f32.xlu0 %v1543
        %v1545 = vpop.xlane.xlu0 %1544
        %v1546 = vsel %vm747, %v1528, -inf
        %1547 = vmax.xlane.f32.xlu0 %v1546
        %v1548 = vpop.xlane.xlu0 %1547
        %v1549 = vsub.f32 %v1408, %v1533
        %v1550 = vsub.f32 %v1432, %v1536
        %v1551 = vsub.f32 %v1456, %v1539
        %v1552 = vsub.f32 %v1480, %v1542
        %v1553 = vsub.f32 %v1504, %v1545
        %v1554 = vsub.f32 %v1528, %v1548
        %v1555 = vmul.f32 %v1549, 1.442695
        %v1556 = vpow.pop %v1555
        %v1557 = vmul.f32 %v1550, 1.442695
        %v1558 = vpow.pop %v1557
        %v1559 = vmul.f32 %v1551, 1.442695
        %v1560 = vpow.pop %v1559
        %v1561 = vmul.f32 %v1552, 1.442695
        %v1562 = vpow.pop %v1561
        %v1563 = vmul.f32 %v1553, 1.442695
        %v1564 = vpow.pop %v1563
        %v1565 = vmul.f32 %v1554, 1.442695
        %v1566 = vpow.pop %v1565
        %v1567 = vsel %vm747, %v1556, 0.0
        %1568 = vadd.xlane.f32.xlu0 %v1567
        %v1569 = vpop.xlane.xlu0 %1568
        %v1570 = vsel %vm747, %v1558, 0.0
        %1571 = vadd.xlane.f32.xlu0 %v1570
        %v1572 = vpop.xlane.xlu0 %1571
        %v1573 = vsel %vm747, %v1560, 0.0
        %1574 = vadd.xlane.f32.xlu0 %v1573
        %v1575 = vpop.xlane.xlu0 %1574
        %v1576 = vsel %vm747, %v1562, 0.0
        %1577 = vadd.xlane.f32.xlu0 %v1576
        %v1578 = vpop.xlane.xlu0 %1577
        %v1579 = vsel %vm747, %v1564, 0.0
        %1580 = vadd.xlane.f32.xlu0 %v1579
        %v1581 = vpop.xlane.xlu0 %1580
        %v1582 = vsel %vm747, %v1566, 0.0
        %1583 = vadd.xlane.f32.xlu0 %v1582
        %v1584 = vpop.xlane.xlu0 %1583
        %v1585 = vrcp.pop %v1569
        %v1586 = vrcp.pop %v1572
        %v1587 = vrcp.pop %v1575
        %v1588 = vrcp.pop %v1578
        %v1589 = vrcp.pop %v1581
        %v1590 = vrcp.pop %v1584
        %v1591 = vmul.f32 %v1556, %v1585
        %v1592 = vmul.f32 %v1558, %v1586
        %v1593 = vmul.f32 %v1560, %v1587
        %v1594 = vmul.f32 %v1562, %v1588
        %v1595 = vmul.f32 %v1564, %v1589
        %v1596 = vmul.f32 %v1566, %v1590
        %v1597 = vpack.c.bf16 %v1591, %v1591
        %v1598 = vpack.c.bf16 %v1592, %v1592
        %v1599 = vpack.c.bf16 %v1593, %v1593
        %v1600 = vpack.c.bf16 %v1594, %v1594
        %v1601 = vpack.c.bf16 %v1595, %v1595
        %v1602 = vpack.c.bf16 %v1596, %v1596
        %1603 = vrot.lane.b32.xlu0 %v1389, 64
        %v1604 = vpop.permute.xlu0 %1603
        %v1606 = vsel %vm747, %v1597, 0
        %v1609 = vsel %vm825, %v1604, 0
        %1611 = vmatpush.bf16.msra.mxu0 0
        %1612 = vmatpush.bf16.msra.mxu0 0
        %1613 = vmatpush.bf16.msra.mxu0 0
        %1614 = vmatpush.bf16.msra.mxu0 0
        %1615 = vmatpush.bf16.msra.mxu0 0
        %1616 = vmatpush.bf16.msra.mxu0 0
        %1617 = vmatpush.bf16.msra.mxu0 0
        %1618 = vmatpush.bf16.msra.mxu0 %v1609
        %1619 = vmatmul.bf16.gmra.mxu0 %v1606
        %v1620 = vpop.f32.mrf.mxu0
        %v1621 = vadd.f32 0.0, %v1620
        %v1622 = vpop.f32.mrf.mxu0
        %1623 = vdwg.mxu0
        %1624 = vrot.lane.b32.xlu0 %v1413, 64
        %v1625 = vpop.permute.xlu0 %1624
        %v1627 = vsel %vm747, %v1598, 0
        %v1630 = vsel %vm825, %v1625, 0
        %1632 = vmatpush.bf16.msra.mxu0 0
        %1633 = vmatpush.bf16.msra.mxu0 0
        %1634 = vmatpush.bf16.msra.mxu0 0
        %1635 = vmatpush.bf16.msra.mxu0 0
        %1636 = vmatpush.bf16.msra.mxu0 0
        %1637 = vmatpush.bf16.msra.mxu0 0
        %1638 = vmatpush.bf16.msra.mxu0 0
        %1639 = vmatpush.bf16.msra.mxu0 %v1630
        %1640 = vmatmul.bf16.gmra.mxu0 %v1627
        %v1641 = vpop.f32.mrf.mxu0
        %v1642 = vadd.f32 0.0, %v1641
        %v1643 = vpop.f32.mrf.mxu0
        %1644 = vdwg.mxu0
        %1645 = vrot.lane.b32.xlu0 %v1437, 64
        %v1646 = vpop.permute.xlu0 %1645
        %v1648 = vsel %vm747, %v1599, 0
        %v1651 = vsel %vm825, %v1646, 0
        %1653 = vmatpush.bf16.msra.mxu0 0
        %1654 = vmatpush.bf16.msra.mxu0 0
        %1655 = vmatpush.bf16.msra.mxu0 0
        %1656 = vmatpush.bf16.msra.mxu0 0
        %1657 = vmatpush.bf16.msra.mxu0 0
        %1658 = vmatpush.bf16.msra.mxu0 0
        %1659 = vmatpush.bf16.msra.mxu0 0
        %1660 = vmatpush.bf16.msra.mxu0 %v1651
        %1661 = vmatmul.bf16.gmra.mxu0 %v1648
        %v1662 = vpop.f32.mrf.mxu0
        %v1663 = vadd.f32 0.0, %v1662
        %v1664 = vpop.f32.mrf.mxu0
        %1665 = vdwg.mxu0
        %1666 = vrot.lane.b32.xlu0 %v1461, 64
        %v1667 = vpop.permute.xlu0 %1666
        %v1669 = vsel %vm747, %v1600, 0
        %v1672 = vsel %vm825, %v1667, 0
        %1674 = vmatpush.bf16.msra.mxu0 0
        %1675 = vmatpush.bf16.msra.mxu0 0
        %1676 = vmatpush.bf16.msra.mxu0 0
        %1677 = vmatpush.bf16.msra.mxu0 0
        %1678 = vmatpush.bf16.msra.mxu0 0
        %1679 = vmatpush.bf16.msra.mxu0 0
        %1680 = vmatpush.bf16.msra.mxu0 0
        %1681 = vmatpush.bf16.msra.mxu0 %v1672
        %1682 = vmatmul.bf16.gmra.mxu0 %v1669
        %v1683 = vpop.f32.mrf.mxu0
        %v1684 = vadd.f32 0.0, %v1683
        %v1685 = vpop.f32.mrf.mxu0
        %1686 = vdwg.mxu0
        %1687 = vrot.lane.b32.xlu0 %v1485, 64
        %v1688 = vpop.permute.xlu0 %1687
        %v1690 = vsel %vm747, %v1601, 0
        %v1693 = vsel %vm825, %v1688, 0
        %1695 = vmatpush.bf16.msra.mxu0 0
        %1696 = vmatpush.bf16.msra.mxu0 0
        %1697 = vmatpush.bf16.msra.mxu0 0
        %1698 = vmatpush.bf16.msra.mxu0 0
        %1699 = vmatpush.bf16.msra.mxu0 0
        %1700 = vmatpush.bf16.msra.mxu0 0
        %1701 = vmatpush.bf16.msra.mxu0 0
        %1702 = vmatpush.bf16.msra.mxu0 %v1693
        %1703 = vmatmul.bf16.gmra.mxu0 %v1690
        %v1704 = vpop.f32.mrf.mxu0
        %v1705 = vadd.f32 0.0, %v1704
        %v1706 = vpop.f32.mrf.mxu0
        %1707 = vdwg.mxu0
        %1708 = vrot.lane.b32.xlu0 %v1509, 64
        %v1709 = vpop.permute.xlu0 %1708
        %v1711 = vsel %vm747, %v1602, 0
        %v1714 = vsel %vm825, %v1709, 0
        %1716 = vmatpush.bf16.msra.mxu0 0
        %1717 = vmatpush.bf16.msra.mxu0 0
        %1718 = vmatpush.bf16.msra.mxu0 0
        %1719 = vmatpush.bf16.msra.mxu0 0
        %1720 = vmatpush.bf16.msra.mxu0 0
        %1721 = vmatpush.bf16.msra.mxu0 0
        %1722 = vmatpush.bf16.msra.mxu0 0
        %1723 = vmatpush.bf16.msra.mxu0 %v1714
        %1724 = vmatmul.bf16.gmra.mxu0 %v1711
        %v1725 = vpop.f32.mrf.mxu0
        %v1726 = vadd.f32 0.0, %v1725
        %v1727 = vpop.f32.mrf.mxu0
        %1728 = vdwg.mxu0
        %1732 = vrot.lane.b32.xlu0 %v1684, 16
        %v1733 = vpop.permute.xlu0 %1732
        %1734 = vrot.lane.b32.xlu0 %v1705, 16
        %v1735 = vpop.permute.xlu0 %1734
        %1736 = vrot.lane.b32.xlu0 %v1726, 16
        %v1737 = vpop.permute.xlu0 %1736
        %v1741 = vsel %vm607, %v1621, %v1733
        %v1742 = vsel %vm607, %v1642, %v1735
        %v1743 = vsel %vm607, %v1663, %v1737
        %v1744 = vpack.c.bf16 %v1742, %v1741
        %v1745 = vpack.c.bf16 %v1743, %v1743
        %s1746 = scalar_lea.vmem %s5, 16
        %v1747 = vld [vmem:[%s1746] sm:$0xf]
        %v1748 = vld [vmem:[%s1746 + $0x4] sm:$0xf]
        %v1749 = vld [vmem:[%s1746 + $0x8] sm:$0xf]
        %v1750 = vld [vmem:[%s1746 + $0xc] sm:$0xf]
        %s1751 = scalar_lea.vmem %s6, 1
        %v1752 = vld [vmem:[%s1751] sm:$0x1]
        %v1754 = vperm.slane %v1752, 0
        %v1760 = vunpack.c.l.b16 %v1747
        %v1761 = vunpack.c.l.b16 %v1748
        %v1762 = vunpack.c.l.b16 %v1749
        %v1763 = vunpack.c.l.b16 %v1750
        %v1764 = vpack.c.b16 %v1761, %v1760
        %v1765 = vpack.c.b16 %v1763, %v1762
        %v1769 = vsel %vm522, %v1744, 0
        %v1772 = vsel %vm522, %v1745, 0
        %1774 = vmatpush.bf16.msra.mxu0 0
        %1775 = vmatpush.bf16.msra.mxu0 0
        %1776 = vmatpush.bf16.msra.mxu0 0
        %1777 = vmatpush.bf16.msra.mxu0 0
        %1778 = vmatpush.bf16.msra.mxu0 0
        %1779 = vmatpush.bf16.msra.mxu0 0
        %1780 = vmatpush.bf16.msra.mxu0 %v1765
        %1781 = vmatpush.bf16.msra.mxu0 %v1764
        %1782 = vmatmul.bf16.gmra.mxu0 %v1769
        %v1783 = vpop.f32.mrf.mxu0
        %v1784 = vadd.f32 %v1754, %v1783
        %v1785 = vpop.f32.mrf.mxu0
        %v1786 = vadd.f32 %v1754, %v1785
        %1787 = vmatmul.bf16.gmra.mxu0 %v1772
        %v1788 = vpop.f32.mrf.mxu0
        %v1789 = vadd.f32 %v1754, %v1788
        %v1790 = vpop.f32.mrf.mxu0
        %1791 = vdwg.mxu0
        %v1792 = vadd.f32 %v1314, %v1784
        %v1793 = vadd.f32 %v1315, %v1786
        %v1794 = vadd.f32 %v1316, %v1789
        %s1795 = scalar_lea.vmem %s7, 1
        %v1796 = vld [vmem:[%s1795] sm:$0x1]
        %s1797 = scalar_lea.vmem %s8, 1
        %v1798 = vld [vmem:[%s1797] sm:$0x1]
        %v1799 = vsel %vm522, %v1792, 0.0
        %1800 = vadd.xlane.f32.xlu0 %v1799
        %v1801 = vpop.xlane.xlu0 %1800
        %v1802 = vsel %vm522, %v1793, 0.0
        %1803 = vadd.xlane.f32.xlu0 %v1802
        %v1804 = vpop.xlane.xlu0 %1803
        %v1805 = vsel %vm522, %v1794, 0.0
        %1806 = vadd.xlane.f32.xlu0 %v1805
        %v1807 = vpop.xlane.xlu0 %1806
        %v1808 = vmul.f32 %v1801, %v1028
        %v1809 = vmul.f32 %v1804, %v1028
        %v1810 = vmul.f32 %v1807, %v1028
        %v1811 = vsub.f32 %v1792, %v1808
        %v1812 = vsub.f32 %v1793, %v1809
        %v1813 = vsub.f32 %v1794, %v1810
        %v1814 = vmul.f32 %v1811, %v1811
        %v1815 = vmul.f32 %v1812, %v1812
        %v1816 = vmul.f32 %v1813, %v1813
        %v1817 = vsel %vm522, %v1814, 0.0
        %1818 = vadd.xlane.f32.xlu0 %v1817
        %v1819 = vpop.xlane.xlu0 %1818
        %v1820 = vsel %vm522, %v1815, 0.0
        %1821 = vadd.xlane.f32.xlu0 %v1820
        %v1822 = vpop.xlane.xlu0 %1821
        %v1823 = vsel %vm522, %v1816, 0.0
        %1824 = vadd.xlane.f32.xlu0 %v1823
        %v1825 = vpop.xlane.xlu0 %1824
        %v1826 = vmul.f32 %v1819, %v1028
        %v1827 = vmul.f32 %v1822, %v1028
        %v1828 = vmul.f32 %v1825, %v1028
        %v1829 = vadd.f32 %v1826, 1e-05
        %v1830 = vadd.f32 %v1827, 1e-05
        %v1831 = vadd.f32 %v1828, 1e-05
        %v1832 = vrsqrt.pop %v1829
        %v1833 = vmul.f32 %v1832, %v1829
        %v1834 = vmul.f32 %v1833, %v1832
        %v1835 = vmul.f32 0.5, %v1834
        %v1836 = vsub.f32 1.5, %v1835
        %v1837 = vmul.f32 %v1832, %v1836
        %vm1838 = vweird.f32 %v1829
        %vm1839 = vweird.f32 %v1832
        %vm1840 = vmor %vm1838, %vm1839
        %v1841 = vsel %vm1840, %v1832, %v1837
        %v1842 = vrsqrt.pop %v1830
        %v1843 = vmul.f32 %v1842, %v1830
        %v1844 = vmul.f32 %v1843, %v1842
        %v1845 = vmul.f32 0.5, %v1844
        %v1846 = vsub.f32 1.5, %v1845
        %v1847 = vmul.f32 %v1842, %v1846
        %vm1848 = vweird.f32 %v1830
        %vm1849 = vweird.f32 %v1842
        %vm1850 = vmor %vm1848, %vm1849
        %v1851 = vsel %vm1850, %v1842, %v1847
        %v1852 = vrsqrt.pop %v1831
        %v1853 = vmul.f32 %v1852, %v1831
        %v1854 = vmul.f32 %v1853, %v1852
        %v1855 = vmul.f32 0.5, %v1854
        %v1856 = vsub.f32 1.5, %v1855
        %v1857 = vmul.f32 %v1852, %v1856
        %vm1858 = vweird.f32 %v1831
        %vm1859 = vweird.f32 %v1852
        %vm1860 = vmor %vm1858, %vm1859
        %v1861 = vsel %vm1860, %v1852, %v1857
        %v1862 = vmul.f32 %v1811, %v1841
        %v1863 = vmul.f32 %v1812, %v1851
        %v1864 = vmul.f32 %v1813, %v1861
        %v1866 = vperm.slane %v1796, 0
        %v1868 = vmul.f32 %v1862, %v1866
        %v1869 = vmul.f32 %v1863, %v1866
        %v1870 = vmul.f32 %v1864, %v1866
        %v1872 = vperm.slane %v1798, 0
        %v1874 = vadd.f32 %v1868, %v1872
        %v1875 = vadd.f32 %v1869, %v1872
        %v1876 = vadd.f32 %v1870, %v1872
        %v1877 = vpack.c.bf16 %v1875, %v1874
        %v1878 = vpack.c.bf16 %v1876, %v1876
        %s1879 = scalar_lea.vmem %s9, 16
        %v1880 = vld [vmem:[%s1879] sm:$0xf]
        %v1881 = vld [vmem:[%s1879 + $0x4] sm:$0xf]
        %v1882 = vld [vmem:[%s1879 + $0x8] sm:$0xf]
        %v1883 = vld [vmem:[%s1879 + $0xc] sm:$0xf]
        %s1884 = scalar_lea.vmem %s10, 1
        %v1885 = vld [vmem:[%s1884] sm:$0x1]
        %v1887 = vperm.slane %v1885, 0
        %v1893 = vunpack.c.l.b16 %v1880
        %v1894 = vunpack.c.l.b16 %v1881
        %v1895 = vunpack.c.l.b16 %v1882
        %v1896 = vunpack.c.l.b16 %v1883
        %v1897 = vpack.c.b16 %v1894, %v1893
        %v1898 = vpack.c.b16 %v1896, %v1895
        %v1902 = vsel %vm522, %v1877, 0
        %v1905 = vsel %vm522, %v1878, 0
        %1907 = vmatpush.bf16.msra.mxu0 0
        %1908 = vmatpush.bf16.msra.mxu0 0
        %1909 = vmatpush.bf16.msra.mxu0 0
        %1910 = vmatpush.bf16.msra.mxu0 0
        %1911 = vmatpush.bf16.msra.mxu0 0
        %1912 = vmatpush.bf16.msra.mxu0 0
        %1913 = vmatpush.bf16.msra.mxu0 %v1898
        %1914 = vmatpush.bf16.msra.mxu0 %v1897
        %1915 = vmatmul.bf16.gmra.mxu0 %v1902
        %v1916 = vpop.f32.mrf.mxu0
        %v1917 = vadd.f32 %v1887, %v1916
        %v1918 = vpop.f32.mrf.mxu0
        %v1919 = vadd.f32 %v1887, %v1918
        %1920 = vmatmul.bf16.gmra.mxu0 %v1905
        %v1921 = vpop.f32.mrf.mxu0
        %v1922 = vadd.f32 %v1887, %v1921
        %v1923 = vpop.f32.mrf.mxu0
        %1924 = vdwg.mxu0
        %v1925 = vmul.f32 %v1917, %v1917
        %v1926 = vmul.f32 %v1919, %v1919
        %v1927 = vmul.f32 %v1922, %v1922
        %v1928 = vmul.f32 %v1917, %v1925
        %v1929 = vmul.f32 %v1919, %v1926
        %v1930 = vmul.f32 %v1922, %v1927
        %v1931 = vmul.f32 %v1928, 0.044715
        %v1932 = vmul.f32 %v1929, 0.044715
        %v1933 = vmul.f32 %v1930, 0.044715
        %v1934 = vadd.f32 %v1917, %v1931
        %v1935 = vadd.f32 %v1919, %v1932
        %v1936 = vadd.f32 %v1922, %v1933
        %v1937 = vmul.f32 %v1934, 0.7978846
        %v1938 = vmul.f32 %v1935, 0.7978846
        %v1939 = vmul.f32 %v1936, 0.7978846
        %v1940 = vtanh.pop %v1937
        %v1941 = vtanh.pop %v1938
        %v1942 = vtanh.pop %v1939
        %v1943 = vadd.f32 %v1940, 1.0
        %v1944 = vadd.f32 %v1941, 1.0
        %v1945 = vadd.f32 %v1942, 1.0
        %v1946 = vmul.f32 %v1943, 0.5
        %v1947 = vmul.f32 %v1944, 0.5
        %v1948 = vmul.f32 %v1945, 0.5
        %v1949 = vmul.f32 %v1917, %v1946
        %v1950 = vmul.f32 %v1919, %v1947
        %v1951 = vmul.f32 %v1922, %v1948
        %v1952 = vpack.c.bf16 %v1950, %v1949
        %v1953 = vpack.c.bf16 %v1951, %v1951
        %s1954 = scalar_lea.vmem %s11, 32
        %v1955 = vld [vmem:[%s1954] sm:$0xf]
        %v1956 = vld [vmem:[%s1954 + $0x4] sm:$0xf]
        %v1957 = vld [vmem:[%s1954 + $0x8] sm:$0xf]
        %v1958 = vld [vmem:[%s1954 + $0xc] sm:$0xf]
        %v1959 = vld [vmem:[%s1954 + $0x10] sm:$0xf]
        %v1960 = vld [vmem:[%s1954 + $0x14] sm:$0xf]
        %v1961 = vld [vmem:[%s1954 + $0x18] sm:$0xf]
        %v1962 = vld [vmem:[%s1954 + $0x1c] sm:$0xf]
        %s1963 = scalar_lea.vmem %s12, 1
        %v1964 = vld [vmem:[%s1963] sm:$0x1]
        %v1966 = vperm.slane %v1964, 0
        %v1976 = vunpack.c.l.b16 %v1955
        %v1977 = vunpack.c.l.b16 %v1956
        %v1978 = vunpack.c.l.b16 %v1957
        %v1979 = vunpack.c.l.b16 %v1958
        %v1980 = vunpack.c.l.b16 %v1959
        %v1981 = vunpack.c.l.b16 %v1960
        %v1982 = vunpack.c.l.b16 %v1961
        %v1983 = vunpack.c.l.b16 %v1962
        %v1984 = vpack.c.b16 %v1977, %v1976
        %v1985 = vpack.c.b16 %v1979, %v1978
        %v1986 = vpack.c.b16 %v1981, %v1980
        %v1987 = vpack.c.b16 %v1983, %v1982
        %v1993 = vsel %vm1209, %v1952, 0
        %v1996 = vsel %vm1209, %v1953, 0
        %1998 = vmatpush.bf16.msra.mxu0 0
        %1999 = vmatpush.bf16.msra.mxu0 0
        %2000 = vmatpush.bf16.msra.mxu0 0
        %2001 = vmatpush.bf16.msra.mxu0 0
        %2002 = vmatpush.bf16.msra.mxu0 %v1987
        %2003 = vmatpush.bf16.msra.mxu0 %v1986
        %2004 = vmatpush.bf16.msra.mxu0 %v1985
        %2005 = vmatpush.bf16.msra.mxu0 %v1984
        %2006 = vmatmul.bf16.gmra.mxu0 %v1993
        %v2007 = vpop.f32.mrf.mxu0
        %v2008 = vadd.f32 %v1966, %v2007
        %v2009 = vpop.f32.mrf.mxu0
        %v2010 = vadd.f32 %v1966, %v2009
        %2011 = vmatmul.bf16.gmra.mxu0 %v1996
        %v2012 = vpop.f32.mrf.mxu0
        %v2013 = vadd.f32 %v1966, %v2012
        %v2014 = vpop.f32.mrf.mxu0
        %2015 = vdwg.mxu0
        %v2016 = vadd.f32 %v1874, %v2008
        %v2017 = vadd.f32 %v1875, %v2010
        %v2018 = vadd.f32 %v1876, %v2013
        %s2019 = scalar_lea.vmem %s13, 1
        %v2020 = vld [vmem:[%s2019] sm:$0x1]
        %s2021 = scalar_lea.vmem %s14, 1
        %v2022 = vld [vmem:[%s2021] sm:$0x1]
        %v2023 = vsel %vm522, %v2016, 0.0
        %2024 = vadd.xlane.f32.xlu0 %v2023
        %v2025 = vpop.xlane.xlu0 %2024
        %v2026 = vsel %vm522, %v2017, 0.0
        %2027 = vadd.xlane.f32.xlu0 %v2026
        %v2028 = vpop.xlane.xlu0 %2027
        %v2029 = vsel %vm522, %v2018, 0.0
        %2030 = vadd.xlane.f32.xlu0 %v2029
        %v2031 = vpop.xlane.xlu0 %2030
        %v2032 = vmul.f32 %v2025, %v1028
        %v2033 = vmul.f32 %v2028, %v1028
        %v2034 = vmul.f32 %v2031, %v1028
        %v2035 = vsub.f32 %v2016, %v2032
        %v2036 = vsub.f32 %v2017, %v2033
        %v2037 = vsub.f32 %v2018, %v2034
        %v2038 = vmul.f32 %v2035, %v2035
        %v2039 = vmul.f32 %v2036, %v2036
        %v2040 = vmul.f32 %v2037, %v2037
        %v2041 = vsel %vm522, %v2038, 0.0
        %2042 = vadd.xlane.f32.xlu0 %v2041
        %v2043 = vpop.xlane.xlu0 %2042
        %v2044 = vsel %vm522, %v2039, 0.0
        %2045 = vadd.xlane.f32.xlu0 %v2044
        %v2046 = vpop.xlane.xlu0 %2045
        %v2047 = vsel %vm522, %v2040, 0.0
        %2048 = vadd.xlane.f32.xlu0 %v2047
        %v2049 = vpop.xlane.xlu0 %2048
        %v2050 = vmul.f32 %v2043, %v1028
        %v2051 = vmul.f32 %v2046, %v1028
        %v2052 = vmul.f32 %v2049, %v1028
        %v2053 = vadd.f32 %v2050, 1e-05
        %v2054 = vadd.f32 %v2051, 1e-05
        %v2055 = vadd.f32 %v2052, 1e-05
        %v2056 = vrsqrt.pop %v2053
        %v2057 = vmul.f32 %v2056, %v2053
        %v2058 = vmul.f32 %v2057, %v2056
        %v2059 = vmul.f32 0.5, %v2058
        %v2060 = vsub.f32 1.5, %v2059
        %v2061 = vmul.f32 %v2056, %v2060
        %vm2062 = vweird.f32 %v2053
        %vm2063 = vweird.f32 %v2056
        %vm2064 = vmor %vm2062, %vm2063
        %v2065 = vsel %vm2064, %v2056, %v2061
        %v2066 = vrsqrt.pop %v2054
        %v2067 = vmul.f32 %v2066, %v2054
        %v2068 = vmul.f32 %v2067, %v2066
        %v2069 = vmul.f32 0.5, %v2068
        %v2070 = vsub.f32 1.5, %v2069
        %v2071 = vmul.f32 %v2066, %v2070
        %vm2072 = vweird.f32 %v2054
        %vm2073 = vweird.f32 %v2066
        %vm2074 = vmor %vm2072, %vm2073
        %v2075 = vsel %vm2074, %v2066, %v2071
        %v2076 = vrsqrt.pop %v2055
        %v2077 = vmul.f32 %v2076, %v2055
        %v2078 = vmul.f32 %v2077, %v2076
        %v2079 = vmul.f32 0.5, %v2078
        %v2080 = vsub.f32 1.5, %v2079
        %v2081 = vmul.f32 %v2076, %v2080
        %vm2082 = vweird.f32 %v2055
        %vm2083 = vweird.f32 %v2076
        %vm2084 = vmor %vm2082, %vm2083
        %v2085 = vsel %vm2084, %v2076, %v2081
        %v2086 = vmul.f32 %v2035, %v2065
        %v2087 = vmul.f32 %v2036, %v2075
        %v2088 = vmul.f32 %v2037, %v2085
        %v2090 = vperm.slane %v2020, 0
        %v2092 = vmul.f32 %v2086, %v2090
        %v2093 = vmul.f32 %v2087, %v2090
        %v2094 = vmul.f32 %v2088, %v2090
        %v2096 = vperm.slane %v2022, 0
        %v2098 = vadd.f32 %v2092, %v2096
        %v2099 = vadd.f32 %v2093, %v2096
        %v2100 = vadd.f32 %v2094, %v2096
        %s2101 = scalar_lea.vmem %s502, 48 [#allocation2]
        %2102 = vst.msk [vmem:[%s2101] sm:$0xff] %vm522, %v2098
        %2103 = vst.msk [vmem:[%s2101 + $0x8] sm:$0xff] %vm522, %v2099
        %2104 = vst.msk [vmem:[%s2101 + $0x10] sm:$0xff] %vm522, %v2100
        %s2105 = sand.u32 %s362, 1
        %s2106 = scalar_lea.sflag [#allocation3], %s2105
        %s2107 = sand.u32 %s362, 1
        %s2108 = smul.addr %s2107, 72
        %s2109 = scalar_lea.vmem [#allocation2], %s2108
        // Predicated region
        $region81: #{forward.1} parent=79 // pred_check
          %p2110 = pneg %p372
        $region82: #{forward.1} parent=79 // pred_check_branch
          %2112 = sbr.rel (%p2110) target = $region84
        $region83: #{forward.1} parent=79 // pred_region
          #allocation5 [shape = 'u32[6]{0}', space=smem, size = 0x18, scoped, tag = 'DMA stride descriptor']
          %2114 = vsyncadd %s2106, 0
          %s2115 = smul.addr %s29, 3
          %s2116 = smul.addr %s2115, 8
          %s2117 = scalar_lea.hbm %s15, %s2116
          %s2119 = sshll.u32 1, 14
          %s2120 = sxor.u32 4294967295, %s2119
          %s2123 = sshll.u32 7, 18
          %s2124 = sxor.u32 4294967295, %s2123
          %s2125 = sand.u32 0, %s2124
          %s2127 = sor.u32 %s2125, 0
          %s2128 = sshll.u32 %s2109, 4
          %s2129 = int_to_ptr.vmem [resolvable:$true] %s2128
          %s2130 = sshll.u32 %s2117, 4
          %s2131 = int_to_ptr.hbm [resolvable:$true] %s2130
          %2137 = sst [smem:[#allocation5]] 384
          %s2138 = scalar_lea.smem [#allocation5], 1
          %2139 = sst [smem:[%s2138]] 768
          %s2140 = scalar_lea.smem [#allocation5], 2
          %2141 = sst [smem:[%s2140]] 3
          %s2142 = scalar_lea.smem [#allocation5], 3
          %2143 = sst [smem:[%s2142]] 128
          %s2144 = scalar_lea.smem [#allocation5], 4
          %2145 = sst [smem:[%s2144]] 128
          %s2146 = scalar_lea.smem [#allocation5], 5
          %2147 = sst [smem:[%s2146]] 8
          %2149 = dma.general %s2129, 1152, %s2131, %s2106, [#allocation4], [#allocation5], %s2127, 0
        $region84: #{forward.1} parent=79 // pred_fallthru
          _
      $region80: #{forward.1} parent=5 // pred_fallthru
        _
      %p2150 = scmp.le.s32.totalorder 2, %s24
      // Predicated region
      $region85: #{forward.1} parent=5 // pred_check
        %p2151 = pneg %p2150
      $region86: #{forward.1} parent=5 // pred_check_branch
        %2153 = sbr.rel (%p2151) target = $region88
      $region87: #{forward.1} parent=5 // pred_region
        %s2154 = ssub.s32 %s24, 2
        // Predicated region
        $region89: #{forward.1} parent=87 // pred_check
          %p2155 = pneg %p378
        $region90: #{forward.1} parent=87 // pred_check_branch
          %2157 = sbr.rel (%p2155) target = $region92
        $region91: #{forward.1} parent=87 // pred_region
          %s2158 = sand.u32 %s363, 1
          %s2159 = scalar_lea.sflag [#allocation3], %s2158
          %s2160 = sand.u32 %s363, 1
          %s2161 = smul.addr %s2160, 72
          %s2162 = scalar_lea.vmem [#allocation2], %s2161
          %2164 = dma.done %s2159, 1152
        $region92: #{forward.1} parent=87 // pred_fallthru
          _
      $region88: #{forward.1} parent=5 // pred_fallthru
        _
    $region6: #{forward.1} parent=1 // loop_footer
      %s28 = sadd.s32 1, %s24
    $region7: #{forward.1} parent=1 // loop_footer_branch
      %23 = sbr.rel target = $region3
    $region8: #{forward.1} parent=1 // loop_exit
      _
    %2165 = vsyncpa [#allocation3], 1
    %s2166 = scalar_lea.sflag [#allocation3], 1
    %2167 = vsyncpa %s2166, 1

</llo_original>
